<compile_context>
chip_gen: v6e
topology: v6e:2x2x1
jax: 0.10.0
libtpu: 0.0.40
codegen_flags: <defaults>
</compile_context>

<pallas_src>
import jax
import jax.numpy as jnp
from jax.experimental import pallas as pl
from jax.experimental.pallas import tpu as pltpu


# ----------------------------------------------------------------------------
# Pallas kernel
# ----------------------------------------------------------------------------
def _make_kernel(C, Cr, HW):
    """Per-batch-element kernel (C, Cr, HW are static)."""

    def kernel(ab_ref, wbT_ref, bbT_ref, wc_ref, bc_ref, wd_ref, bd_ref,
               x_ref, o_ref):
        # ab_ref : SMEM (2,)       [alpha, beta]
        # wbT_ref: VMEM (C, Cr)    conv_b weight, pre-transposed on host
        # bbT_ref: VMEM (1, Cr)    conv_b bias
        # wc_ref : VMEM (Cr, C)    conv_c weight
        # bc_ref : VMEM (Cr, 1)    conv_c bias
        # wd_ref : VMEM (C, C)     conv_d weight
        # bd_ref : VMEM (C, 1)     conv_d bias
        # x_ref  : VMEM (1, C, HW) input slab (lane-dense)
        # o_ref  : VMEM (1, C, HW) output slab
        x = x_ref[0]                                    # (C, HW) f32
        xT = jnp.transpose(x)                           # (HW, C) tile-aligned transpose

        # ---------------- Position attention module (PAM) ----------------
        # feat_b^T = x^T Wb^T + bb  -> (HW, Cr)   (avoids a trans_a matmul)
        fbT = jnp.dot(xT, wbT_ref[...],
                      preferred_element_type=jnp.float32) + bbT_ref[...]
        # feat_c = Wc x + bc -> (Cr, HW);   feat_d = Wd x + bd -> (C, HW)
        fc = jnp.dot(wc_ref[...], x,
                     preferred_element_type=jnp.float32) + bc_ref[...]
        fd = jnp.dot(wd_ref[...], x,
                     preferred_element_type=jnp.float32) + bd_ref[...]

        # attention_s = softmax_rows(feat_b^T feat_c)   -> (HW, HW)
        logits = jnp.dot(fbT, fc, preferred_element_type=jnp.float32)
        m = jnp.max(logits, axis=-1, keepdims=True)
        p = jnp.exp(logits - m)
        attn_s = p / jnp.sum(p, axis=-1, keepdims=True)

        # feat_e_pam[c, j] = sum_i feat_d[c, i] * attn_s[j, i]   (trans_b form)
        feat_pam = jax.lax.dot_general(
            fd, attn_s, (((1,), (1,)), ((), ())),
            preferred_element_type=jnp.float32)          # (C, HW)

        # ---------------- Channel attention module (CAM) -----------------
        # gram[c, k] = sum_n x[c, n] x[k, n]   (trans_b form) -> (C, C)
        g = jax.lax.dot_general(
            x, x, (((1,), (1,)), ((), ())),
            preferred_element_type=jnp.float32)
        gn = jnp.max(g, axis=-1, keepdims=True) - g
        mg = jnp.max(gn, axis=-1, keepdims=True)
        pg = jnp.exp(gn - mg)
        attn_c = pg / jnp.sum(pg, axis=-1, keepdims=True)  # (C, C) row-softmax

        feat_cam = jnp.dot(attn_c, x,
                           preferred_element_type=jnp.float32)  # (C, HW)

        # ------------------------- combine --------------------------------
        # DAAttBlock: (alpha*pam + x) + (beta*cam + x)
        alpha = ab_ref[0]
        beta = ab_ref[1]
        out = alpha * feat_pam + beta * feat_cam + 2.0 * x
        o_ref[0] = out.astype(o_ref.dtype)

    return kernel


def da_att_block(x, wb, bb, wc, bc, wd, bd, alpha, beta):
    """x: (B, C, H, W) f32.  wb/wc: (Cr, C), wd: (C, C), biases 1-D.  alpha/beta: (1,)."""
    B, C, H, W = x.shape
    HW = H * W
    Cr = wb.shape[0]

    x_flat = x.reshape(B, C, HW)                 # free reshape for contiguous NCHW
    wbT = jnp.transpose(wb)                      # (C, Cr)
    bbT = bb.reshape(1, Cr)
    bc2 = bc.reshape(Cr, 1)
    bd2 = bd.reshape(C, 1)
    ab = jnp.concatenate([alpha, beta]).astype(jnp.float32)  # (2,)

    kern = _make_kernel(C, Cr, HW)

    grid_spec = pltpu.PrefetchScalarGridSpec(
        num_scalar_prefetch=0,
        grid=(B,),
        in_specs=[
            pl.BlockSpec(memory_space=pltpu.MemorySpace.SMEM),      # alpha/beta
            pl.BlockSpec((C, Cr), lambda b: (0, 0)),                # Wb^T
            pl.BlockSpec((1, Cr), lambda b: (0, 0)),                # bb
            pl.BlockSpec((Cr, C), lambda b: (0, 0)),                # Wc
            pl.BlockSpec((Cr, 1), lambda b: (0, 0)),                # bc
            pl.BlockSpec((C, C), lambda b: (0, 0)),                 # Wd
            pl.BlockSpec((C, 1), lambda b: (0, 0)),                 # bd
            pl.BlockSpec((1, C, HW), lambda b: (b, 0, 0)),          # x slab
        ],
        out_specs=pl.BlockSpec((1, C, HW), lambda b: (b, 0, 0)),
    )

    out_flat = pl.pallas_call(
        kern,
        out_shape=jax.ShapeDtypeStruct((B, C, HW), x.dtype),
        grid_spec=grid_spec,
        compiler_params=pltpu.CompilerParams(
            dimension_semantics=("parallel",),
            vmem_limit_bytes=32 * 1024 * 1024,
        ),
    )(ab, wbT, bbT, wc, bc2, wd, bd2, x_flat)

    return out_flat.reshape(B, C, H, W)


# ----------------------------------------------------------------------------
# Pure-JAX reference (mirrors the PyTorch module)
# ----------------------------------------------------------------------------
def da_att_ref(x, wb, bb, wc, bc, wd, bd, alpha, beta):
    B, C, H, W = x.shape
    HW = H * W
    hp = jax.lax.Precision.HIGHEST
    xf = x.reshape(B, C, HW)

    # Position attention module
    fb = jnp.einsum("oc,bcn->bon", wb, xf, precision=hp) + bb[None, :, None]
    fc = jnp.einsum("oc,bcn->bon", wc, xf, precision=hp) + bc[None, :, None]
    fd = jnp.einsum("oc,bcn->bon", wd, xf, precision=hp) + bd[None, :, None]
    logits = jnp.einsum("bki,bkj->bij", fb, fc, precision=hp)     # (B, HW, HW)
    attn_s = jax.nn.softmax(logits, axis=-1)
    feat_pam = jnp.einsum("bci,bji->bcj", fd, attn_s, precision=hp)  # (B, C, HW)

    # Channel attention module
    g = jnp.einsum("bci,bki->bck", xf, xf, precision=hp)          # (B, C, C)
    gn = jnp.max(g, axis=-1, keepdims=True) - g
    attn_c = jax.nn.softmax(gn, axis=-1)
    feat_cam = jnp.einsum("bck,bkn->bcn", attn_c, xf, precision=hp)  # (B, C, HW)

    out = alpha[0] * feat_pam + beta[0] * feat_cam + 2.0 * xf
    return out.reshape(B, C, H, W)


# ----------------------------------------------------------------------------
# Main
# ----------------------------------------------------------------------------
if __name__ == "__main__":
    B, C, H, W = 2, 16, 16, 16
    reduction = 8
    Cr = C // reduction  # 2

    key = jax.random.PRNGKey(0)
    kx, k1, k2, k3, k4, k5, k6 = jax.random.split(key, 7)
    x = jax.random.normal(kx, (B, C, H, W), jnp.float32)

    # Deterministic parameters for the three 1x1 convs + the two scale params.
    wb = jax.random.normal(k1, (Cr, C), jnp.float32) * 0.2
    bb = jax.random.normal(k2, (Cr,), jnp.float32) * 0.5
    wc = jax.random.normal(k3, (Cr, C), jnp.float32) * 0.2
    bc = jax.random.normal(k4, (Cr,), jnp.float32) * 0.5
    wd = jax.random.normal(k5, (C, C), jnp.float32) * 0.2
    bd = jax.random.normal(k6, (C,), jnp.float32) * 0.5
    # nn.Parameter(torch.zeros(1)) in the module; use nonzero values so the
    # attention paths are actually exercised by the check.
    alpha = jnp.full((1,), 0.7, jnp.float32)
    beta = jnp.full((1,), 0.4, jnp.float32)

    out = da_att_block(x, wb, bb, wc, bc, wd, bd, alpha, beta)
    out = jax.block_until_ready(out)

    ref = da_att_ref(x, wb, bb, wc, bc, wd, bd, alpha, beta)
    assert out.shape == (B, C, H, W)
    if not jnp.allclose(out, ref, atol=5e-3, rtol=5e-3):
        max_err = float(jnp.max(jnp.abs(out - ref)))
        raise ValueError(f"Pallas kernel output does not match reference (max abs err {max_err})")

    print("KERNEL_OK")
</pallas_src>

<mosaic_0001>
module attributes {stable_mosaic.version = 11 : i64} {
  func.func @kernel(%arg0: i32, %arg1: memref<2xf32, #tpu.memory_space<smem>>, %arg2: memref<16x2xf32, #tpu.memory_space<vmem>>, %arg3: memref<1x2xf32, #tpu.memory_space<vmem>>, %arg4: memref<2x16xf32, #tpu.memory_space<vmem>>, %arg5: memref<2x1xf32, #tpu.memory_space<vmem>>, %arg6: memref<16x16xf32, #tpu.memory_space<vmem>>, %arg7: memref<16x1xf32, #tpu.memory_space<vmem>>, %arg8: memref<1x16x256xf32, #tpu.memory_space<vmem>>, %arg9: memref<1x16x256xf32, #tpu.memory_space<vmem>>) attributes {dimension_semantics = [#tpu.dimension_semantics<parallel>], iteration_bounds = array<i64: 2>, scalar_prefetch = 0 : i64, scratch_operands = 0 : i64, tpu.core_type = #tpu.core_type<tc>, window_params = [{transform_indices = @transform_0, window_bounds = array<i64: 2>}, {pipeline_mode = #tpu.pipeline_mode<synchronous>, transform_indices = @transform_1, window_bounds = array<i64: 16, 2>}, {pipeline_mode = #tpu.pipeline_mode<synchronous>, transform_indices = @transform_2, window_bounds = array<i64: 1, 2>}, {pipeline_mode = #tpu.pipeline_mode<synchronous>, transform_indices = @transform_3, window_bounds = array<i64: 2, 16>}, {pipeline_mode = #tpu.pipeline_mode<synchronous>, transform_indices = @transform_4, window_bounds = array<i64: 2, 1>}, {pipeline_mode = #tpu.pipeline_mode<synchronous>, transform_indices = @transform_5, window_bounds = array<i64: 16, 16>}, {pipeline_mode = #tpu.pipeline_mode<synchronous>, transform_indices = @transform_6, window_bounds = array<i64: 16, 1>}, {transform_indices = @transform_7, window_bounds = array<i64: 1, 16, 256>}, {transform_indices = @transform_8, window_bounds = array<i64: 1, 16, 256>}]} {
    %c0 = arith.constant 0 : index
    %c0_0 = arith.constant 0 : index
    %c0_1 = arith.constant 0 : index
    %0 = vector.load %arg8[%c0, %c0_0, %c0_1] : memref<1x16x256xf32, #tpu.memory_space<vmem>>, vector<1x16x256xf32>
    %1 = vector.shape_cast %0 : vector<1x16x256xf32> to vector<16x256xf32>
    %2 = tpu.transpose %1, [1, 0] : vector<16x256xf32> -> vector<256x16xf32>
    %c0_2 = arith.constant 0 : index
    %c0_3 = arith.constant 0 : index
    %3 = vector.load %arg2[%c0_2, %c0_3] : memref<16x2xf32, #tpu.memory_space<vmem>>, vector<16x2xf32>
    %cst = arith.constant dense<0.000000e+00> : vector<256x2xf32>
    %4 = tpu.matmul %2, %3, %cst {dimension_numbers = #tpu.dot_dimension_numbers<[1], [0], [0], [1], [0, 0, 1, 1], [], []>} : vector<256x16xf32>, vector<16x2xf32>, vector<256x2xf32> -> vector<256x2xf32>
    %c0_4 = arith.constant 0 : index
    %c0_5 = arith.constant 0 : index
    %5 = vector.load %arg3[%c0_4, %c0_5] : memref<1x2xf32, #tpu.memory_space<vmem>>, vector<1x2xf32>
    %6 = vector.broadcast %5 : vector<1x2xf32> to vector<256x2xf32>
    %7 = arith.addf %4, %6 : vector<256x2xf32>
    %c0_6 = arith.constant 0 : index
    %c0_7 = arith.constant 0 : index
    %8 = vector.load %arg4[%c0_6, %c0_7] : memref<2x16xf32, #tpu.memory_space<vmem>>, vector<2x16xf32>
    %cst_8 = arith.constant dense<0.000000e+00> : vector<2x256xf32>
    %9 = tpu.matmul %8, %1, %cst_8 {dimension_numbers = #tpu.dot_dimension_numbers<[1], [0], [0], [1], [0, 0, 1, 1], [], []>} : vector<2x16xf32>, vector<16x256xf32>, vector<2x256xf32> -> vector<2x256xf32>
    %c0_9 = arith.constant 0 : index
    %c0_10 = arith.constant 0 : index
    %10 = vector.load %arg5[%c0_9, %c0_10] : memref<2x1xf32, #tpu.memory_space<vmem>>, vector<2x1xf32>
    %11 = vector.broadcast %10 : vector<2x1xf32> to vector<2x256xf32>
    %12 = arith.addf %9, %11 : vector<2x256xf32>
    %c0_11 = arith.constant 0 : index
    %c0_12 = arith.constant 0 : index
    %13 = vector.load %arg6[%c0_11, %c0_12] : memref<16x16xf32, #tpu.memory_space<vmem>>, vector<16x16xf32>
    %cst_13 = arith.constant dense<0.000000e+00> : vector<16x256xf32>
    %14 = tpu.matmul %13, %1, %cst_13 {dimension_numbers = #tpu.dot_dimension_numbers<[1], [0], [0], [1], [0, 0, 1, 1], [], []>} : vector<16x16xf32>, vector<16x256xf32>, vector<16x256xf32> -> vector<16x256xf32>
    %c0_14 = arith.constant 0 : index
    %c0_15 = arith.constant 0 : index
    %15 = vector.load %arg7[%c0_14, %c0_15] : memref<16x1xf32, #tpu.memory_space<vmem>>, vector<16x1xf32>
    %16 = vector.broadcast %15 : vector<16x1xf32> to vector<16x256xf32>
    %17 = arith.addf %14, %16 : vector<16x256xf32>
    %cst_16 = arith.constant dense<0.000000e+00> : vector<256x256xf32>
    %18 = tpu.matmul %7, %12, %cst_16 {dimension_numbers = #tpu.dot_dimension_numbers<[1], [0], [0], [1], [0, 0, 1, 1], [], []>} : vector<256x2xf32>, vector<2x256xf32>, vector<256x256xf32> -> vector<256x256xf32>
    %cst_17 = arith.constant dense<0xFF800000> : vector<256xf32>
    %19 = vector.multi_reduction <maximumf>, %18, %cst_17 [1] : vector<256x256xf32> to vector<256xf32>
    %20 = vector.shape_cast %19 : vector<256xf32> to vector<256x1xf32>
    %21 = vector.broadcast %20 : vector<256x1xf32> to vector<256x256xf32>
    %22 = arith.subf %18, %21 : vector<256x256xf32>
    %23 = math.exp %22 : vector<256x256xf32>
    %cst_18 = arith.constant dense<0.000000e+00> : vector<256xf32>
    %24 = vector.multi_reduction <add>, %23, %cst_18 [1] : vector<256x256xf32> to vector<256xf32>
    %25 = vector.shape_cast %24 : vector<256xf32> to vector<256x1xf32>
    %26 = vector.broadcast %25 : vector<256x1xf32> to vector<256x256xf32>
    %27 = arith.divf %23, %26 : vector<256x256xf32>
    %cst_19 = arith.constant dense<0.000000e+00> : vector<16x256xf32>
    %28 = tpu.matmul %17, %27, %cst_19 {dimension_numbers = #tpu.dot_dimension_numbers<[1], [1], [0], [0], [0, 0, 1, 0], [], []>} : vector<16x256xf32>, vector<256x256xf32>, vector<16x256xf32> -> vector<16x256xf32>
    %cst_20 = arith.constant dense<0.000000e+00> : vector<16x16xf32>
    %29 = tpu.matmul %1, %1, %cst_20 {dimension_numbers = #tpu.dot_dimension_numbers<[1], [1], [0], [0], [0, 0, 1, 0], [], []>} : vector<16x256xf32>, vector<16x256xf32>, vector<16x16xf32> -> vector<16x16xf32>
    %cst_21 = arith.constant dense<0xFF800000> : vector<16xf32>
    %30 = vector.multi_reduction <maximumf>, %29, %cst_21 [1] : vector<16x16xf32> to vector<16xf32>
    %31 = vector.shape_cast %30 : vector<16xf32> to vector<16x1xf32>
    %32 = vector.broadcast %31 : vector<16x1xf32> to vector<16x16xf32>
    %33 = arith.subf %32, %29 : vector<16x16xf32>
    %cst_22 = arith.constant dense<0xFF800000> : vector<16xf32>
    %34 = vector.multi_reduction <maximumf>, %33, %cst_22 [1] : vector<16x16xf32> to vector<16xf32>
    %35 = vector.shape_cast %34 : vector<16xf32> to vector<16x1xf32>
    %36 = vector.broadcast %35 : vector<16x1xf32> to vector<16x16xf32>
    %37 = arith.subf %33, %36 : vector<16x16xf32>
    %38 = math.exp %37 : vector<16x16xf32>
    %cst_23 = arith.constant dense<0.000000e+00> : vector<16xf32>
    %39 = vector.multi_reduction <add>, %38, %cst_23 [1] : vector<16x16xf32> to vector<16xf32>
    %40 = vector.shape_cast %39 : vector<16xf32> to vector<16x1xf32>
    %41 = vector.broadcast %40 : vector<16x1xf32> to vector<16x16xf32>
    %42 = arith.divf %38, %41 : vector<16x16xf32>
    %cst_24 = arith.constant dense<0.000000e+00> : vector<16x256xf32>
    %43 = tpu.matmul %42, %1, %cst_24 {dimension_numbers = #tpu.dot_dimension_numbers<[1], [0], [0], [1], [0, 0, 1, 1], [], []>} : vector<16x16xf32>, vector<16x256xf32>, vector<16x256xf32> -> vector<16x256xf32>
    %c0_25 = arith.constant 0 : index
    %44 = memref.load %arg1[%c0_25] : memref<2xf32, #tpu.memory_space<smem>>
    %c1 = arith.constant 1 : index
    %45 = memref.load %arg1[%c1] : memref<2xf32, #tpu.memory_space<smem>>
    %46 = vector.broadcast %44 : f32 to vector<16x256xf32>
    %47 = arith.mulf %46, %28 : vector<16x256xf32>
    %48 = vector.broadcast %45 : f32 to vector<16x256xf32>
    %49 = arith.mulf %48, %43 : vector<16x256xf32>
    %50 = arith.addf %47, %49 : vector<16x256xf32>
    %cst_26 = arith.constant 2.000000e+00 : f32
    %51 = vector.broadcast %cst_26 : f32 to vector<16x256xf32>
    %52 = arith.mulf %51, %1 : vector<16x256xf32>
    %53 = arith.addf %50, %52 : vector<16x256xf32>
    %c0_27 = arith.constant 0 : index
    %c0_28 = arith.constant 0 : index
    %c0_29 = arith.constant 0 : index
    %54 = vector.load %arg9[%c0_27, %c0_28, %c0_29] : memref<1x16x256xf32, #tpu.memory_space<vmem>>, vector<1x16x256xf32>
    %55 = vector.shape_cast %54 : vector<1x16x256xf32> to vector<16x256xf32>
    %56 = vector.shape_cast %53 : vector<16x256xf32> to vector<1x16x256xf32>
    tpu.vector_store %arg9[%c0_27, %c0_28, %c0_29], %56 {strides = array<i32>} : memref<1x16x256xf32, #tpu.memory_space<vmem>>, vector<1x16x256xf32>,
    return
  }
  func.func @transform_0(%arg0: i32) -> i32 {
    %c0_i32 = arith.constant 0 : i32
    %c0_i32_0 = arith.constant 0 : i32
    return %c0_i32 : i32
  }
  func.func @transform_1(%arg0: i32) -> (i32, i32) {
    %c0_i32 = arith.constant 0 : i32
    %c0_i32_0 = arith.constant 0 : i32
    %c0_i32_1 = arith.constant 0 : i32
    return %c0_i32, %c0_i32_0 : i32, i32
  }
  func.func @transform_2(%arg0: i32) -> (i32, i32) {
    %c0_i32 = arith.constant 0 : i32
    %c0_i32_0 = arith.constant 0 : i32
    %c0_i32_1 = arith.constant 0 : i32
    return %c0_i32, %c0_i32_0 : i32, i32
  }
  func.func @transform_3(%arg0: i32) -> (i32, i32) {
    %c0_i32 = arith.constant 0 : i32
    %c0_i32_0 = arith.constant 0 : i32
    %c0_i32_1 = arith.constant 0 : i32
    return %c0_i32, %c0_i32_0 : i32, i32
  }
  func.func @transform_4(%arg0: i32) -> (i32, i32) {
    %c0_i32 = arith.constant 0 : i32
    %c0_i32_0 = arith.constant 0 : i32
    %c0_i32_1 = arith.constant 0 : i32
    return %c0_i32, %c0_i32_0 : i32, i32
  }
  func.func @transform_5(%arg0: i32) -> (i32, i32) {
    %c0_i32 = arith.constant 0 : i32
    %c0_i32_0 = arith.constant 0 : i32
    %c0_i32_1 = arith.constant 0 : i32
    return %c0_i32, %c0_i32_0 : i32, i32
  }
  func.func @transform_6(%arg0: i32) -> (i32, i32) {
    %c0_i32 = arith.constant 0 : i32
    %c0_i32_0 = arith.constant 0 : i32
    %c0_i32_1 = arith.constant 0 : i32
    return %c0_i32, %c0_i32_0 : i32, i32
  }
  func.func @transform_7(%arg0: i32) -> (i32, i32, i32) {
    %c0_i32 = arith.constant 0 : i32
    %c0_i32_0 = arith.constant 0 : i32
    %c0_i32_1 = arith.constant 0 : i32
    return %arg0, %c0_i32, %c0_i32_0 : i32, i32, i32
  }
  func.func @transform_8(%arg0: i32) -> (i32, i32, i32) {
    %c0_i32 = arith.constant 0 : i32
    %c0_i32_0 = arith.constant 0 : i32
    %c0_i32_1 = arith.constant 0 : i32
    return %arg0, %c0_i32, %c0_i32_0 : i32, i32, i32
  }
}

</mosaic_0001>

<llo_original>
// kernel: tpu_custom_call.1
$region0: #{tpu_custom_call.1}
  #allocation0 [shape = 'u32[]', space=smem, size = 0x4, offset = 0x4, fixed_abs, tag = 'smem constant byte address 0x4 - core index']
  #allocation1 [shape = 'u32[144,128]{1,0:T(1,128)}', space=vmem, size = 0x12000, scoped, tag = 'internal scratch']
  %s0 = inlined_call_operand.vmem [shape: f32[2], index: 0, kind: input, shape index: {}]
  %s1 = inlined_call_operand.vmem [shape: f32[16,2], index: 1, kind: input, shape index: {}]
  %s2 = inlined_call_operand.vmem [shape: f32[1,2], index: 2, kind: input, shape index: {}]
  %s3 = inlined_call_operand.vmem [shape: f32[2,16], index: 3, kind: input, shape index: {}]
  %s4 = inlined_call_operand.vmem [shape: f32[2,1], index: 4, kind: input, shape index: {}]
  %s5 = inlined_call_operand.vmem [shape: f32[16,16], index: 5, kind: input, shape index: {}]
  %s6 = inlined_call_operand.vmem [shape: f32[16,1], index: 6, kind: input, shape index: {}]
  %s7 = inlined_call_operand.hbm [shape: f32[2,16,256], index: 7, kind: input, shape index: {}]
  %s8 = inlined_call_operand.hbm [shape: f32[2,16,256], index: 8, kind: output, shape index: {}]
  %s9 = sld [smem:[#allocation0]]
  $region73: #{tpu_custom_call.1} parent=0
    _
  %s11 = ssub.s32 1, %s9
  %s12 = scalar_select 0, %s11, %s9
  $region1: #{tpu_custom_call.1} parent=0
    #allocation2 [shape = 'u8[512]{0}', space=smem, size = 0x200, scoped, tag = 'input window, operand 0, single buffered']
    #allocation3 [shape = 's32[2]{0}', space=sflag, size = 0x8, scoped, tag = 'scoped memory for tpu_custom_call.1']
    #allocation4 [shape = 's32[2]{0}', space=sflag, size = 0x8, scoped, tag = 'scoped memory for tpu_custom_call.1']
    #allocation5 [shape = 's32[2]{0}', space=sflag, size = 0x8, scoped, tag = 'scoped memory for tpu_custom_call.1']
    #allocation6 [shape = 'u8[32768]{0}', space=vmem, size = 0x8000, scoped, tag = 'input window, operand 7']
    #allocation7 [shape = 'u8[32768]{0}', space=vmem, size = 0x8000, scoped, tag = 'output window, operand 0']
    %13 = vsyncpa [#allocation5], 0
    %14 = vsyncpa [#allocation3], 0
    %s15 = scalar_lea.sflag [#allocation3], 1
    %16 = vsyncpa %s15, 0
    %17 = vsyncpa [#allocation4], 0
    %s18 = scalar_lea.sflag [#allocation4], 1
    %19 = vsyncpa %s18, 0
    loop: start=0, step=1, limit=4
    $region2: #{tpu_custom_call.1} parent=1 // loop_pre_header
      _
    $region3: #{tpu_custom_call.1} parent=1 // loop_header
      %s21 = sphi 0, %s25
      %p22 = scmp.ge.s32.totalorder %s21, 4
      %s29 = sphi 0, %s29
      %s31 = sphi 0, %s29
      %s32 = sphi 0, %s31
      %s46 = sphi 0, %s32
      %s50 = sphi 0, %s50
      %s52 = sphi 0, %s50
      %s53 = sphi 0, %s52
      %s67 = sphi 0, %s53
      %s71 = sphi 0, %s71
      %s73 = sphi 0, %s71
      %s74 = sphi 0, %s73
      %s88 = sphi 0, %s74
      %s92 = sphi 0, %s92
      %s94 = sphi 0, %s92
      %s95 = sphi 0, %s94
      %s109 = sphi 0, %s95
      %s113 = sphi 0, %s113
      %s115 = sphi 0, %s113
      %s116 = sphi 0, %s115
      %s130 = sphi 0, %s116
      %s134 = sphi 0, %s134
      %s136 = sphi 0, %s134
      %s137 = sphi 0, %s136
      %s151 = sphi 0, %s137
      %s155 = sphi 0, %s155
      %s157 = sphi 0, %s155
      %s158 = sphi 0, %s157
      %s172 = sphi 0, %s158
      %s178 = sphi 0, %s180
      %s181 = sphi 0, %s178
      %s182 = sphi 0, %s181
      %s198 = sphi 0, %s182
      %s204 = sphi 0, %s206
      %s207 = sphi 0, %s204
      %s208 = sphi 0, %s207
      %s224 = sphi 0, %s208
    $region4: #{tpu_custom_call.1} parent=1 // loop_header_branch
      %24 = sbr.rel (%p22) target = $region8
    $region5: #{tpu_custom_call.1} parent=1 // loop_body
      %s26 = ssub.s32 %s21, 1
      %s27 = ssub.s32 %s21, 2
      %s28 = sadd.s32 %s21, 1
      %s30 = sadd.s32 %s29, 1
      %p33 = scmp.eq.s32.totalorder %s21, 1
      %p34 = scmp.ne.s32.totalorder %s29, %s31
      %p35 = scmp.eq.s32.totalorder %s21, 0
      %p36 = por %p34, %p35
      %p37 = scmp.ne.s32.totalorder %s29, %s31
      %p38 = scmp.eq.s32.totalorder %s26, 1
      %p39 = por %p37, %p38
      %p40 = scmp.ne.s32.totalorder %s31, %s32
      %p41 = scmp.eq.s32.totalorder %s26, 0
      %p42 = por %p40, %p41
      %p43 = scmp.ne.s32.totalorder %s31, %s32
      %p44 = scmp.eq.s32.totalorder %s27, 1
      %p45 = por %p43, %p44
      %p47 = scmp.ne.s32.totalorder %s32, %s46
      %p48 = scmp.eq.s32.totalorder %s27, 0
      %p49 = por %p47, %p48
      %s51 = sadd.s32 %s50, 1
      %p54 = scmp.eq.s32.totalorder %s21, 1
      %p55 = scmp.ne.s32.totalorder %s50, %s52
      %p56 = scmp.eq.s32.totalorder %s21, 0
      %p57 = por %p55, %p56
      %p58 = scmp.ne.s32.totalorder %s50, %s52
      %p59 = scmp.eq.s32.totalorder %s26, 1
      %p60 = por %p58, %p59
      %p61 = scmp.ne.s32.totalorder %s52, %s53
      %p62 = scmp.eq.s32.totalorder %s26, 0
      %p63 = por %p61, %p62
      %p64 = scmp.ne.s32.totalorder %s52, %s53
      %p65 = scmp.eq.s32.totalorder %s27, 1
      %p66 = por %p64, %p65
      %p68 = scmp.ne.s32.totalorder %s53, %s67
      %p69 = scmp.eq.s32.totalorder %s27, 0
      %p70 = por %p68, %p69
      %s72 = sadd.s32 %s71, 1
      %p75 = scmp.eq.s32.totalorder %s21, 1
      %p76 = scmp.ne.s32.totalorder %s71, %s73
      %p77 = scmp.eq.s32.totalorder %s21, 0
      %p78 = por %p76, %p77
      %p79 = scmp.ne.s32.totalorder %s71, %s73
      %p80 = scmp.eq.s32.totalorder %s26, 1
      %p81 = por %p79, %p80
      %p82 = scmp.ne.s32.totalorder %s73, %s74
      %p83 = scmp.eq.s32.totalorder %s26, 0
      %p84 = por %p82, %p83
      %p85 = scmp.ne.s32.totalorder %s73, %s74
      %p86 = scmp.eq.s32.totalorder %s27, 1
      %p87 = por %p85, %p86
      %p89 = scmp.ne.s32.totalorder %s74, %s88
      %p90 = scmp.eq.s32.totalorder %s27, 0
      %p91 = por %p89, %p90
      %s93 = sadd.s32 %s92, 1
      %p96 = scmp.eq.s32.totalorder %s21, 1
      %p97 = scmp.ne.s32.totalorder %s92, %s94
      %p98 = scmp.eq.s32.totalorder %s21, 0
      %p99 = por %p97, %p98
      %p100 = scmp.ne.s32.totalorder %s92, %s94
      %p101 = scmp.eq.s32.totalorder %s26, 1
      %p102 = por %p100, %p101
      %p103 = scmp.ne.s32.totalorder %s94, %s95
      %p104 = scmp.eq.s32.totalorder %s26, 0
      %p105 = por %p103, %p104
      %p106 = scmp.ne.s32.totalorder %s94, %s95
      %p107 = scmp.eq.s32.totalorder %s27, 1
      %p108 = por %p106, %p107
      %p110 = scmp.ne.s32.totalorder %s95, %s109
      %p111 = scmp.eq.s32.totalorder %s27, 0
      %p112 = por %p110, %p111
      %s114 = sadd.s32 %s113, 1
      %p117 = scmp.eq.s32.totalorder %s21, 1
      %p118 = scmp.ne.s32.totalorder %s113, %s115
      %p119 = scmp.eq.s32.totalorder %s21, 0
      %p120 = por %p118, %p119
      %p121 = scmp.ne.s32.totalorder %s113, %s115
      %p122 = scmp.eq.s32.totalorder %s26, 1
      %p123 = por %p121, %p122
      %p124 = scmp.ne.s32.totalorder %s115, %s116
      %p125 = scmp.eq.s32.totalorder %s26, 0
      %p126 = por %p124, %p125
      %p127 = scmp.ne.s32.totalorder %s115, %s116
      %p128 = scmp.eq.s32.totalorder %s27, 1
      %p129 = por %p127, %p128
      %p131 = scmp.ne.s32.totalorder %s116, %s130
      %p132 = scmp.eq.s32.totalorder %s27, 0
      %p133 = por %p131, %p132
      %s135 = sadd.s32 %s134, 1
      %p138 = scmp.eq.s32.totalorder %s21, 1
      %p139 = scmp.ne.s32.totalorder %s134, %s136
      %p140 = scmp.eq.s32.totalorder %s21, 0
      %p141 = por %p139, %p140
      %p142 = scmp.ne.s32.totalorder %s134, %s136
      %p143 = scmp.eq.s32.totalorder %s26, 1
      %p144 = por %p142, %p143
      %p145 = scmp.ne.s32.totalorder %s136, %s137
      %p146 = scmp.eq.s32.totalorder %s26, 0
      %p147 = por %p145, %p146
      %p148 = scmp.ne.s32.totalorder %s136, %s137
      %p149 = scmp.eq.s32.totalorder %s27, 1
      %p150 = por %p148, %p149
      %p152 = scmp.ne.s32.totalorder %s137, %s151
      %p153 = scmp.eq.s32.totalorder %s27, 0
      %p154 = por %p152, %p153
      %s156 = sadd.s32 %s155, 1
      %p159 = scmp.eq.s32.totalorder %s21, 1
      %p160 = scmp.ne.s32.totalorder %s155, %s157
      %p161 = scmp.eq.s32.totalorder %s21, 0
      %p162 = por %p160, %p161
      %p163 = scmp.ne.s32.totalorder %s155, %s157
      %p164 = scmp.eq.s32.totalorder %s26, 1
      %p165 = por %p163, %p164
      %p166 = scmp.ne.s32.totalorder %s157, %s158
      %p167 = scmp.eq.s32.totalorder %s26, 0
      %p168 = por %p166, %p167
      %p169 = scmp.ne.s32.totalorder %s157, %s158
      %p170 = scmp.eq.s32.totalorder %s27, 1
      %p171 = por %p169, %p170
      %p173 = scmp.ne.s32.totalorder %s158, %s172
      %p174 = scmp.eq.s32.totalorder %s27, 0
      %p175 = por %p173, %p174
      %s176 = ssub.s32 %s21, %s28
      %p177 = scmp.eq.s32.totalorder %s176, 0
      %s179 = sadd.s32 %s178, 1
      %s180 = scalar_select %p177, %s178, %s179
      %p183 = pneg %p177
      %p184 = scmp.eq.s32.totalorder %s21, 1
      %p185 = por %p183, %p184
      %p186 = scmp.ne.s32.totalorder %s178, %s181
      %p187 = scmp.eq.s32.totalorder %s21, 0
      %p188 = por %p186, %p187
      %p189 = scmp.ne.s32.totalorder %s178, %s181
      %p190 = scmp.eq.s32.totalorder %s26, 1
      %p191 = por %p189, %p190
      %p192 = scmp.ne.s32.totalorder %s181, %s182
      %p193 = scmp.eq.s32.totalorder %s26, 0
      %p194 = por %p192, %p193
      %p195 = scmp.ne.s32.totalorder %s181, %s182
      %p196 = scmp.eq.s32.totalorder %s27, 1
      %p197 = por %p195, %p196
      %p199 = scmp.ne.s32.totalorder %s182, %s198
      %p200 = scmp.eq.s32.totalorder %s27, 0
      %p201 = por %p199, %p200
      %s202 = ssub.s32 %s21, %s28
      %p203 = scmp.eq.s32.totalorder %s202, 0
      %s205 = sadd.s32 %s204, 1
      %s206 = scalar_select %p203, %s204, %s205
      %p209 = pneg %p203
      %p210 = scmp.eq.s32.totalorder %s21, 1
      %p211 = por %p209, %p210
      %p212 = scmp.ne.s32.totalorder %s204, %s207
      %p213 = scmp.eq.s32.totalorder %s21, 0
      %p214 = por %p212, %p213
      %p215 = scmp.ne.s32.totalorder %s204, %s207
      %p216 = scmp.eq.s32.totalorder %s26, 1
      %p217 = por %p215, %p216
      %p218 = scmp.ne.s32.totalorder %s207, %s208
      %p219 = scmp.eq.s32.totalorder %s26, 0
      %p220 = por %p218, %p219
      %p221 = scmp.ne.s32.totalorder %s207, %s208
      %p222 = scmp.eq.s32.totalorder %s27, 1
      %p223 = por %p221, %p222
      %p225 = scmp.ne.s32.totalorder %s208, %s224
      %p226 = scmp.eq.s32.totalorder %s27, 0
      %p227 = por %p225, %p226
      %p228 = scmp.le.s32.totalorder 1, %s21
      %p229 = scmp.lt.s32.totalorder %s21, 3
      %p230 = pnand %p228, %p229
      %p231 = pneg %p230
      // Predicated region
      $region9: #{tpu_custom_call.1} parent=5 // pred_check
        _
      $region10: #{tpu_custom_call.1} parent=5 // pred_check_branch
        %233 = sbr.rel (%p230) target = $region12
      $region11: #{tpu_custom_call.1} parent=5 // pred_region
        %s234 = ssub.s32 %s21, 1
        // Predicated region
        $region13: #{tpu_custom_call.1} parent=11 // pred_check
          %p235 = pneg %p42
        $region14: #{tpu_custom_call.1} parent=11 // pred_check_branch
          %237 = sbr.rel (%p235) target = $region16
        $region15: #{tpu_custom_call.1} parent=11 // pred_region
          %s239 = ssub.s32 16, 16
          %240 = vsyncadd [#allocation5], %s239
          %s242 = sshll.u32 %s0, 4
          %s243 = int_to_ptr.vmem [resolvable:$true] %s242
          %245 = dma.vmem_to_smem %s243, 16, [#allocation2], [#allocation5]
        $region16: #{tpu_custom_call.1} parent=11 // pred_fallthru
          _
        // Predicated region
        $region17: #{tpu_custom_call.1} parent=11 // pred_check
          %p246 = pneg %p63
        $region18: #{tpu_custom_call.1} parent=11 // pred_check_branch
          %248 = sbr.rel (%p246) target = $region20
        $region19: #{tpu_custom_call.1} parent=11 // pred_region
          _
        $region20: #{tpu_custom_call.1} parent=11 // pred_fallthru
          _
        // Predicated region
        $region21: #{tpu_custom_call.1} parent=11 // pred_check
          %p249 = pneg %p84
        $region22: #{tpu_custom_call.1} parent=11 // pred_check_branch
          %251 = sbr.rel (%p249) target = $region24
        $region23: #{tpu_custom_call.1} parent=11 // pred_region
          _
        $region24: #{tpu_custom_call.1} parent=11 // pred_fallthru
          _
        // Predicated region
        $region25: #{tpu_custom_call.1} parent=11 // pred_check
          %p252 = pneg %p105
        $region26: #{tpu_custom_call.1} parent=11 // pred_check_branch
          %254 = sbr.rel (%p252) target = $region28
        $region27: #{tpu_custom_call.1} parent=11 // pred_region
          _
        $region28: #{tpu_custom_call.1} parent=11 // pred_fallthru
          _
        // Predicated region
        $region29: #{tpu_custom_call.1} parent=11 // pred_check
          %p255 = pneg %p126
        $region30: #{tpu_custom_call.1} parent=11 // pred_check_branch
          %257 = sbr.rel (%p255) target = $region32
        $region31: #{tpu_custom_call.1} parent=11 // pred_region
          _
        $region32: #{tpu_custom_call.1} parent=11 // pred_fallthru
          _
        // Predicated region
        $region33: #{tpu_custom_call.1} parent=11 // pred_check
          %p258 = pneg %p147
        $region34: #{tpu_custom_call.1} parent=11 // pred_check_branch
          %260 = sbr.rel (%p258) target = $region36
        $region35: #{tpu_custom_call.1} parent=11 // pred_region
          _
        $region36: #{tpu_custom_call.1} parent=11 // pred_fallthru
          _
        // Predicated region
        $region37: #{tpu_custom_call.1} parent=11 // pred_check
          %p261 = pneg %p168
        $region38: #{tpu_custom_call.1} parent=11 // pred_check_branch
          %263 = sbr.rel (%p261) target = $region40
        $region39: #{tpu_custom_call.1} parent=11 // pred_region
          _
        $region40: #{tpu_custom_call.1} parent=11 // pred_fallthru
          _
      $region12: #{tpu_custom_call.1} parent=5 // pred_fallthru
        _
      %p264 = scmp.lt.s32.totalorder %s21, 2
      // Predicated region
      $region41: #{tpu_custom_call.1} parent=5 // pred_check
        %p265 = pneg %p264
      $region42: #{tpu_custom_call.1} parent=5 // pred_check_branch
        %267 = sbr.rel (%p265) target = $region44
      $region43: #{tpu_custom_call.1} parent=5 // pred_region
        // Predicated region
        $region45: #{tpu_custom_call.1} parent=43 // pred_check
          %p268 = pneg %p188
        $region46: #{tpu_custom_call.1} parent=43 // pred_check_branch
          %270 = sbr.rel (%p268) target = $region48
        $region47: #{tpu_custom_call.1} parent=43 // pred_region
          %s271 = sand.u32 %s178, 1
          %s272 = scalar_lea.sflag [#allocation3], %s271
          %s273 = sand.u32 %s178, 1
          %s274 = smul.addr %s273, 32
          %s275 = scalar_lea.vmem [#allocation6], %s274
          %s277 = ssub.s32 512, 512
          %278 = vsyncadd %s272, %s277
          %s279 = smul.addr %s21, 4
          %s280 = smul.addr %s279, 128
          %s281 = scalar_lea.hbm %s7, %s280
          %s282 = sshll.u32 %s275, 4
          %s283 = int_to_ptr.vmem [resolvable:$true] %s282
          %288 = dma.hbm_to_vmem [thread:$0]  %s281, 512, %s283, %s272, 256, 256, 16
        $region48: #{tpu_custom_call.1} parent=43 // pred_fallthru
          _
      $region44: #{tpu_custom_call.1} parent=5 // pred_fallthru
        _
      %p289 = scmp.le.s32.totalorder 1, %s21
      %p290 = scmp.lt.s32.totalorder %s21, 3
      %p291 = pnand %p289, %p290
      %p292 = pneg %p291
      // Predicated region
      $region49: #{tpu_custom_call.1} parent=5 // pred_check
        _
      $region50: #{tpu_custom_call.1} parent=5 // pred_check_branch
        %294 = sbr.rel (%p291) target = $region52
      $region51: #{tpu_custom_call.1} parent=5 // pred_region
        %s295 = ssub.s32 %s21, 1
        // Predicated region
        $region53: #{tpu_custom_call.1} parent=51 // pred_check
          %p296 = pneg %p42
        $region54: #{tpu_custom_call.1} parent=51 // pred_check_branch
          %298 = sbr.rel (%p296) target = $region56
        $region55: #{tpu_custom_call.1} parent=51 // pred_region
          %299 = dma.done [#allocation5], 16
        $region56: #{tpu_custom_call.1} parent=51 // pred_fallthru
          _
        %s300 = sand.u32 %s181, 1
        %s301 = scalar_lea.sflag [#allocation3], %s300
        %s302 = sand.u32 %s181, 1
        %s303 = smul.addr %s302, 32
        %s304 = scalar_lea.vmem [#allocation6], %s303
        // Predicated region
        $region57: #{tpu_custom_call.1} parent=51 // pred_check
          %p305 = pneg %p194
        $region58: #{tpu_custom_call.1} parent=51 // pred_check_branch
          %307 = sbr.rel (%p305) target = $region60
        $region59: #{tpu_custom_call.1} parent=51 // pred_region
          %308 = dma.done %s301, 512
        $region60: #{tpu_custom_call.1} parent=51 // pred_fallthru
          _
        %309 = sfence
        %p310 = pneg %p42
        %p311 = pneg %p39
        %p312 = pneg %p63
        %p313 = pneg %p60
        %p314 = pneg %p84
        %p315 = pneg %p81
        %p316 = pneg %p105
        %p317 = pneg %p102
        %p318 = pneg %p126
        %p319 = pneg %p123
        %p320 = pneg %p147
        %p321 = pneg %p144
        %p322 = pneg %p168
        %p323 = pneg %p165
        %s324 = sand.u32 %s181, 1
        %s325 = scalar_lea.sflag [#allocation3], %s324
        %s326 = sand.u32 %s181, 1
        %s327 = smul.addr %s326, 32
        %s328 = scalar_lea.vmem [#allocation6], %s327
        %p329 = pneg %p194
        %p330 = pneg %p191
        %p331 = pneg %p220
        %p332 = pneg %p217
        %s333 = sand.u32 %s207, 1
        %s334 = scalar_lea.sflag [#allocation4], %s333
        %s335 = sand.u32 %s207, 1
        %s336 = smul.addr %s335, 32
        %s337 = scalar_lea.vmem [#allocation7], %s336
        %v338 = vld [vmem:[%s304] sm:$0xff]
        %v339 = vld [vmem:[%s304 + $0x8] sm:$0xff]
        %v340 = vld [vmem:[%s304 + $0x10] sm:$0xff]
        %v341 = vld [vmem:[%s304 + $0x18] sm:$0xff]
        %342 = vxpose.xlu0.b32.start [1/16] %v338, 128
        %343 = vxpose.xlu0.b32.cont [2/16] %v340, 128
        %344 = vxpose.xlu0.b32.cont [3/16] 0.0, 128
        %345 = vxpose.xlu0.b32.cont [4/16] 0.0, 128
        %346 = vxpose.xlu0.b32.cont [5/16] 0.0, 128
        %347 = vxpose.xlu0.b32.cont [6/16] 0.0, 128
        %348 = vxpose.xlu0.b32.cont [7/16] 0.0, 128
        %349 = vxpose.xlu0.b32.cont [8/16] 0.0, 128
        %350 = vxpose.xlu0.b32.cont [9/16] 0.0, 128
        %351 = vxpose.xlu0.b32.cont [10/16] 0.0, 128
        %352 = vxpose.xlu0.b32.cont [11/16] 0.0, 128
        %353 = vxpose.xlu0.b32.cont [12/16] 0.0, 128
        %354 = vxpose.xlu0.b32.cont [13/16] 0.0, 128
        %355 = vxpose.xlu0.b32.cont [14/16] 0.0, 128
        %356 = vxpose.xlu0.b32.cont [15/16] 0.0, 128
        %357 = vxpose.xlu0.b32.end [16/16] 0.0, 128
        %v358 = vpop.trf.xlu0
        %v359 = vpop.trf.xlu0
        %v360 = vpop.trf.xlu0
        %v361 = vpop.trf.xlu0
        %v362 = vpop.trf.xlu0
        %v363 = vpop.trf.xlu0
        %v364 = vpop.trf.xlu0
        %v365 = vpop.trf.xlu0
        %v366 = vpop.trf.xlu0
        %v367 = vpop.trf.xlu0
        %v368 = vpop.trf.xlu0
        %v369 = vpop.trf.xlu0
        %v370 = vpop.trf.xlu0
        %v371 = vpop.trf.xlu0
        %v372 = vpop.trf.xlu0
        %v373 = vpop.trf.xlu0
        %374 = vxpose.xlu0.b32.start [1/16] %v339, 128
        %375 = vxpose.xlu0.b32.cont [2/16] %v341, 128
        %376 = vxpose.xlu0.b32.cont [3/16] 0.0, 128
        %377 = vxpose.xlu0.b32.cont [4/16] 0.0, 128
        %378 = vxpose.xlu0.b32.cont [5/16] 0.0, 128
        %379 = vxpose.xlu0.b32.cont [6/16] 0.0, 128
        %380 = vxpose.xlu0.b32.cont [7/16] 0.0, 128
        %381 = vxpose.xlu0.b32.cont [8/16] 0.0, 128
        %382 = vxpose.xlu0.b32.cont [9/16] 0.0, 128
        %383 = vxpose.xlu0.b32.cont [10/16] 0.0, 128
        %384 = vxpose.xlu0.b32.cont [11/16] 0.0, 128
        %385 = vxpose.xlu0.b32.cont [12/16] 0.0, 128
        %386 = vxpose.xlu0.b32.cont [13/16] 0.0, 128
        %387 = vxpose.xlu0.b32.cont [14/16] 0.0, 128
        %388 = vxpose.xlu0.b32.cont [15/16] 0.0, 128
        %389 = vxpose.xlu0.b32.end [16/16] 0.0, 128
        %v390 = vpop.trf.xlu0
        %v391 = vpop.trf.xlu0
        %v392 = vpop.trf.xlu0
        %v393 = vpop.trf.xlu0
        %v394 = vpop.trf.xlu0
        %v395 = vpop.trf.xlu0
        %v396 = vpop.trf.xlu0
        %v397 = vpop.trf.xlu0
        %v398 = vpop.trf.xlu0
        %v399 = vpop.trf.xlu0
        %v400 = vpop.trf.xlu0
        %v401 = vpop.trf.xlu0
        %v402 = vpop.trf.xlu0
        %v403 = vpop.trf.xlu0
        %v404 = vpop.trf.xlu0
        %v405 = vpop.trf.xlu0
        %v406 = vld [vmem:[%s1] sm:$0xff]
        %v407 = vld [vmem:[%s1 + $0x8] sm:$0xff]
        %v408 = vld [vmem:[%s2] sm:$0x1]
        %v410 = vlaneseq
        %v411 = vshrl.u32 %v410, 7
        %v412 = vsub.s32 0, %v411
        %v413 = vrot.slane %v408, %v412
        %vm415 = vcmask 130048
        %v417 = vsel %vm415, %v358, 0
        %v420 = vsel %vm415, %v359, 0
        %v423 = vsel %vm415, %v360, 0
        %v426 = vsel %vm415, %v361, 0
        %v429 = vsel %vm415, %v362, 0
        %v432 = vsel %vm415, %v363, 0
        %v435 = vsel %vm415, %v364, 0
        %v438 = vsel %vm415, %v365, 0
        %v441 = vsel %vm415, %v366, 0
        %v444 = vsel %vm415, %v367, 0
        %v447 = vsel %vm415, %v368, 0
        %v450 = vsel %vm415, %v369, 0
        %v453 = vsel %vm415, %v370, 0
        %v456 = vsel %vm415, %v371, 0
        %v459 = vsel %vm415, %v372, 0
        %v462 = vsel %vm415, %v373, 0
        %v465 = vsel %vm415, %v390, 0
        %v468 = vsel %vm415, %v391, 0
        %v471 = vsel %vm415, %v392, 0
        %v474 = vsel %vm415, %v393, 0
        %v477 = vsel %vm415, %v394, 0
        %v480 = vsel %vm415, %v395, 0
        %v483 = vsel %vm415, %v396, 0
        %v486 = vsel %vm415, %v397, 0
        %v489 = vsel %vm415, %v398, 0
        %v492 = vsel %vm415, %v399, 0
        %v495 = vsel %vm415, %v400, 0
        %v498 = vsel %vm415, %v401, 0
        %v501 = vsel %vm415, %v402, 0
        %v504 = vsel %vm415, %v403, 0
        %v507 = vsel %vm415, %v404, 0
        %v510 = vsel %vm415, %v405, 0
        %512 = vmatprep.subr.mxu0 0.0
        %513 = vmatpush1.msra.mxu0 0.0
        %514 = vmatprep.subr.mxu0 0.0
        %515 = vmatpush1.msra.mxu0 0.0
        %516 = vmatprep.subr.mxu0 0.0
        %517 = vmatpush1.msra.mxu0 0.0
        %518 = vmatprep.subr.mxu0 0.0
        %519 = vmatpush1.msra.mxu0 0.0
        %520 = vmatprep.subr.mxu0 0.0
        %521 = vmatpush1.msra.mxu0 0.0
        %522 = vmatprep.subr.mxu0 0.0
        %523 = vmatpush1.msra.mxu0 0.0
        %524 = vmatprep.subr.mxu0 0.0
        %525 = vmatpush1.msra.mxu0 0.0
        %526 = vmatprep.subr.mxu0 0.0
        %527 = vmatpush1.msra.mxu0 0.0
        %528 = vmatprep.subr.mxu0 0.0
        %529 = vmatpush1.msra.mxu0 0.0
        %530 = vmatprep.subr.mxu0 0.0
        %531 = vmatpush1.msra.mxu0 0.0
        %532 = vmatprep.subr.mxu0 0.0
        %533 = vmatpush1.msra.mxu0 0.0
        %534 = vmatprep.subr.mxu0 0.0
        %535 = vmatpush1.msra.mxu0 0.0
        %536 = vmatprep.subr.mxu0 0.0
        %537 = vmatpush1.msra.mxu0 0.0
        %538 = vmatprep.subr.mxu0 0.0
        %539 = vmatpush1.msra.mxu0 0.0
        %540 = vmatprep.subr.mxu0 0.0
        %541 = vmatpush1.msra.mxu0 %v407
        %542 = vmatprep.subr.mxu0 0.0
        %543 = vmatpush1.msra.mxu0 %v406
        %544 = vmatprep.subr.mxu0 0.0
        %545 = vmatpush2.msra.mxu0 0.0
        %546 = vmatprep.subr.mxu0 0.0
        %547 = vmatpush2.msra.mxu0 0.0
        %548 = vmatprep.subr.mxu0 0.0
        %549 = vmatpush2.msra.mxu0 0.0
        %550 = vmatprep.subr.mxu0 0.0
        %551 = vmatpush2.msra.mxu0 0.0
        %552 = vmatprep.subr.mxu0 0.0
        %553 = vmatpush2.msra.mxu0 0.0
        %554 = vmatprep.subr.mxu0 0.0
        %555 = vmatpush2.msra.mxu0 0.0
        %556 = vmatprep.subr.mxu0 0.0
        %557 = vmatpush2.msra.mxu0 0.0
        %558 = vmatprep.subr.mxu0 0.0
        %559 = vmatpush2.msra.mxu0 0.0
        %560 = vmatprep.subr.mxu0 0.0
        %561 = vmatpush2.msra.mxu0 0.0
        %562 = vmatprep.subr.mxu0 0.0
        %563 = vmatpush2.msra.mxu0 0.0
        %564 = vmatprep.subr.mxu0 0.0
        %565 = vmatpush2.msra.mxu0 0.0
        %566 = vmatprep.subr.mxu0 0.0
        %567 = vmatpush2.msra.mxu0 0.0
        %568 = vmatprep.subr.mxu0 0.0
        %569 = vmatpush2.msra.mxu0 0.0
        %570 = vmatprep.subr.mxu0 0.0
        %571 = vmatpush2.msra.mxu0 0.0
        %572 = vmatprep.subr.mxu0 0.0
        %573 = vmatpush2.msra.mxu0 0.0
        %574 = vmatprep.subr.mxu0 0.0
        %575 = vmatpush2.msra.mxu0 0.0
        %576 = vmatprep.mubr.f32.mxu0 0.0
        %577 = vmatmul.mubr.f32.gmra.mxu0 %v417
        %v578 = vpop.f32.mrf.mxu0
        %v579 = vadd.f32 %v413, %v578
        %v580 = vpop.f32.mrf.mxu0
        %581 = vmatprep.mubr.f32.mxu0 0.0
        %582 = vmatmul.mubr.f32.gmra.mxu0 %v420
        %v583 = vpop.f32.mrf.mxu0
        %v584 = vadd.f32 %v413, %v583
        %v585 = vpop.f32.mrf.mxu0
        %586 = vmatprep.mubr.f32.mxu0 0.0
        %587 = vmatmul.mubr.f32.gmra.mxu0 %v423
        %v588 = vpop.f32.mrf.mxu0
        %v589 = vadd.f32 %v413, %v588
        %v590 = vpop.f32.mrf.mxu0
        %591 = vmatprep.mubr.f32.mxu0 0.0
        %592 = vmatmul.mubr.f32.gmra.mxu0 %v426
        %v593 = vpop.f32.mrf.mxu0
        %v594 = vadd.f32 %v413, %v593
        %v595 = vpop.f32.mrf.mxu0
        %596 = vmatprep.mubr.f32.mxu0 0.0
        %597 = vmatmul.mubr.f32.gmra.mxu0 %v429
        %v598 = vpop.f32.mrf.mxu0
        %v599 = vadd.f32 %v413, %v598
        %v600 = vpop.f32.mrf.mxu0
        %601 = vmatprep.mubr.f32.mxu0 0.0
        %602 = vmatmul.mubr.f32.gmra.mxu0 %v432
        %v603 = vpop.f32.mrf.mxu0
        %v604 = vadd.f32 %v413, %v603
        %v605 = vpop.f32.mrf.mxu0
        %606 = vmatprep.mubr.f32.mxu0 0.0
        %607 = vmatmul.mubr.f32.gmra.mxu0 %v435
        %v608 = vpop.f32.mrf.mxu0
        %v609 = vadd.f32 %v413, %v608
        %v610 = vpop.f32.mrf.mxu0
        %611 = vmatprep.mubr.f32.mxu0 0.0
        %612 = vmatmul.mubr.f32.gmra.mxu0 %v438
        %v613 = vpop.f32.mrf.mxu0
        %v614 = vadd.f32 %v413, %v613
        %v615 = vpop.f32.mrf.mxu0
        %616 = vmatprep.mubr.f32.mxu0 0.0
        %617 = vmatmul.mubr.f32.gmra.mxu0 %v441
        %v618 = vpop.f32.mrf.mxu0
        %v619 = vadd.f32 %v413, %v618
        %v620 = vpop.f32.mrf.mxu0
        %621 = vmatprep.mubr.f32.mxu0 0.0
        %622 = vmatmul.mubr.f32.gmra.mxu0 %v444
        %v623 = vpop.f32.mrf.mxu0
        %v624 = vadd.f32 %v413, %v623
        %v625 = vpop.f32.mrf.mxu0
        %626 = vmatprep.mubr.f32.mxu0 0.0
        %627 = vmatmul.mubr.f32.gmra.mxu0 %v447
        %v628 = vpop.f32.mrf.mxu0
        %v629 = vadd.f32 %v413, %v628
        %v630 = vpop.f32.mrf.mxu0
        %631 = vmatprep.mubr.f32.mxu0 0.0
        %632 = vmatmul.mubr.f32.gmra.mxu0 %v450
        %v633 = vpop.f32.mrf.mxu0
        %v634 = vadd.f32 %v413, %v633
        %v635 = vpop.f32.mrf.mxu0
        %636 = vmatprep.mubr.f32.mxu0 0.0
        %637 = vmatmul.mubr.f32.gmra.mxu0 %v453
        %v638 = vpop.f32.mrf.mxu0
        %v639 = vadd.f32 %v413, %v638
        %v640 = vpop.f32.mrf.mxu0
        %641 = vmatprep.mubr.f32.mxu0 0.0
        %642 = vmatmul.mubr.f32.gmra.mxu0 %v456
        %v643 = vpop.f32.mrf.mxu0
        %v644 = vadd.f32 %v413, %v643
        %v645 = vpop.f32.mrf.mxu0
        %646 = vmatprep.mubr.f32.mxu0 0.0
        %647 = vmatmul.mubr.f32.gmra.mxu0 %v459
        %v648 = vpop.f32.mrf.mxu0
        %v649 = vadd.f32 %v413, %v648
        %v650 = vpop.f32.mrf.mxu0
        %651 = vmatprep.mubr.f32.mxu0 0.0
        %652 = vmatmul.mubr.f32.gmra.mxu0 %v462
        %v653 = vpop.f32.mrf.mxu0
        %v654 = vadd.f32 %v413, %v653
        %v655 = vpop.f32.mrf.mxu0
        %656 = vmatprep.mubr.f32.mxu0 0.0
        %657 = vmatmul.mubr.f32.gmra.mxu0 %v465
        %v658 = vpop.f32.mrf.mxu0
        %v659 = vadd.f32 %v413, %v658
        %v660 = vpop.f32.mrf.mxu0
        %661 = vmatprep.mubr.f32.mxu0 0.0
        %662 = vmatmul.mubr.f32.gmra.mxu0 %v468
        %v663 = vpop.f32.mrf.mxu0
        %v664 = vadd.f32 %v413, %v663
        %v665 = vpop.f32.mrf.mxu0
        %666 = vmatprep.mubr.f32.mxu0 0.0
        %667 = vmatmul.mubr.f32.gmra.mxu0 %v471
        %v668 = vpop.f32.mrf.mxu0
        %v669 = vadd.f32 %v413, %v668
        %v670 = vpop.f32.mrf.mxu0
        %671 = vmatprep.mubr.f32.mxu0 0.0
        %672 = vmatmul.mubr.f32.gmra.mxu0 %v474
        %v673 = vpop.f32.mrf.mxu0
        %v674 = vadd.f32 %v413, %v673
        %v675 = vpop.f32.mrf.mxu0
        %676 = vmatprep.mubr.f32.mxu0 0.0
        %677 = vmatmul.mubr.f32.gmra.mxu0 %v477
        %v678 = vpop.f32.mrf.mxu0
        %v679 = vadd.f32 %v413, %v678
        %v680 = vpop.f32.mrf.mxu0
        %681 = vmatprep.mubr.f32.mxu0 0.0
        %682 = vmatmul.mubr.f32.gmra.mxu0 %v480
        %v683 = vpop.f32.mrf.mxu0
        %v684 = vadd.f32 %v413, %v683
        %v685 = vpop.f32.mrf.mxu0
        %686 = vmatprep.mubr.f32.mxu0 0.0
        %687 = vmatmul.mubr.f32.gmra.mxu0 %v483
        %v688 = vpop.f32.mrf.mxu0
        %v689 = vadd.f32 %v413, %v688
        %v690 = vpop.f32.mrf.mxu0
        %691 = vmatprep.mubr.f32.mxu0 0.0
        %692 = vmatmul.mubr.f32.gmra.mxu0 %v486
        %v693 = vpop.f32.mrf.mxu0
        %v694 = vadd.f32 %v413, %v693
        %v695 = vpop.f32.mrf.mxu0
        %696 = vmatprep.mubr.f32.mxu0 0.0
        %697 = vmatmul.mubr.f32.gmra.mxu0 %v489
        %v698 = vpop.f32.mrf.mxu0
        %v699 = vadd.f32 %v413, %v698
        %v700 = vpop.f32.mrf.mxu0
        %701 = vmatprep.mubr.f32.mxu0 0.0
        %702 = vmatmul.mubr.f32.gmra.mxu0 %v492
        %v703 = vpop.f32.mrf.mxu0
        %v704 = vadd.f32 %v413, %v703
        %v705 = vpop.f32.mrf.mxu0
        %706 = vmatprep.mubr.f32.mxu0 0.0
        %707 = vmatmul.mubr.f32.gmra.mxu0 %v495
        %v708 = vpop.f32.mrf.mxu0
        %v709 = vadd.f32 %v413, %v708
        %v710 = vpop.f32.mrf.mxu0
        %711 = vmatprep.mubr.f32.mxu0 0.0
        %712 = vmatmul.mubr.f32.gmra.mxu0 %v498
        %v713 = vpop.f32.mrf.mxu0
        %v714 = vadd.f32 %v413, %v713
        %v715 = vpop.f32.mrf.mxu0
        %716 = vmatprep.mubr.f32.mxu0 0.0
        %717 = vmatmul.mubr.f32.gmra.mxu0 %v501
        %v718 = vpop.f32.mrf.mxu0
        %v719 = vadd.f32 %v413, %v718
        %v720 = vpop.f32.mrf.mxu0
        %721 = vmatprep.mubr.f32.mxu0 0.0
        %722 = vmatmul.mubr.f32.gmra.mxu0 %v504
        %v723 = vpop.f32.mrf.mxu0
        %v724 = vadd.f32 %v413, %v723
        %v725 = vpop.f32.mrf.mxu0
        %726 = vmatprep.mubr.f32.mxu0 0.0
        %727 = vmatmul.mubr.f32.gmra.mxu0 %v507
        %v728 = vpop.f32.mrf.mxu0
        %v729 = vadd.f32 %v413, %v728
        %v730 = vpop.f32.mrf.mxu0
        %731 = vmatprep.mubr.f32.mxu0 0.0
        %732 = vmatmul.mubr.f32.gmra.mxu0 %v510
        %v733 = vpop.f32.mrf.mxu0
        %v734 = vadd.f32 %v413, %v733
        %v735 = vpop.f32.mrf.mxu0
        %736 = vdwg.mxu0
        %v737 = vld [vmem:[%s3] sm:$0x3]
        %v738 = vld [vmem:[%s4] sm:$0x3]
        %740 = vset.pattern.permute.xlu0 0
        %741 = vperm.xlu0 %740, %v738
        %v742 = vpop.permute.xlu0 %741
        %v745 = vsel %vm415, %v737, 0
        %747 = vmatprep.subr.mxu0 0.0
        %748 = vmatpush1.msra.mxu0 0.0
        %749 = vmatprep.subr.mxu0 0.0
        %750 = vmatpush1.msra.mxu0 0.0
        %751 = vmatprep.subr.mxu0 0.0
        %752 = vmatpush1.msra.mxu0 0.0
        %753 = vmatprep.subr.mxu0 0.0
        %754 = vmatpush1.msra.mxu0 0.0
        %755 = vmatprep.subr.mxu0 0.0
        %756 = vmatpush1.msra.mxu0 0.0
        %757 = vmatprep.subr.mxu0 0.0
        %758 = vmatpush1.msra.mxu0 0.0
        %759 = vmatprep.subr.mxu0 0.0
        %760 = vmatpush1.msra.mxu0 0.0
        %761 = vmatprep.subr.mxu0 0.0
        %762 = vmatpush1.msra.mxu0 0.0
        %763 = vmatprep.subr.mxu0 0.0
        %764 = vmatpush1.msra.mxu0 0.0
        %765 = vmatprep.subr.mxu0 0.0
        %766 = vmatpush1.msra.mxu0 0.0
        %767 = vmatprep.subr.mxu0 0.0
        %768 = vmatpush1.msra.mxu0 0.0
        %769 = vmatprep.subr.mxu0 0.0
        %770 = vmatpush1.msra.mxu0 0.0
        %771 = vmatprep.subr.mxu0 0.0
        %772 = vmatpush1.msra.mxu0 0.0
        %773 = vmatprep.subr.mxu0 0.0
        %774 = vmatpush1.msra.mxu0 0.0
        %775 = vmatprep.subr.mxu0 %v341
        %776 = vmatpush1.msra.mxu0 %v340
        %777 = vmatprep.subr.mxu0 %v339
        %778 = vmatpush1.msra.mxu0 %v338
        %779 = vmatprep.subr.mxu0 0.0
        %780 = vmatpush2.msra.mxu0 0.0
        %781 = vmatprep.subr.mxu0 0.0
        %782 = vmatpush2.msra.mxu0 0.0
        %783 = vmatprep.subr.mxu0 0.0
        %784 = vmatpush2.msra.mxu0 0.0
        %785 = vmatprep.subr.mxu0 0.0
        %786 = vmatpush2.msra.mxu0 0.0
        %787 = vmatprep.subr.mxu0 0.0
        %788 = vmatpush2.msra.mxu0 0.0
        %789 = vmatprep.subr.mxu0 0.0
        %790 = vmatpush2.msra.mxu0 0.0
        %791 = vmatprep.subr.mxu0 0.0
        %792 = vmatpush2.msra.mxu0 0.0
        %793 = vmatprep.subr.mxu0 0.0
        %794 = vmatpush2.msra.mxu0 0.0
        %795 = vmatprep.subr.mxu0 0.0
        %796 = vmatpush2.msra.mxu0 0.0
        %797 = vmatprep.subr.mxu0 0.0
        %798 = vmatpush2.msra.mxu0 0.0
        %799 = vmatprep.subr.mxu0 0.0
        %800 = vmatpush2.msra.mxu0 0.0
        %801 = vmatprep.subr.mxu0 0.0
        %802 = vmatpush2.msra.mxu0 0.0
        %803 = vmatprep.subr.mxu0 0.0
        %804 = vmatpush2.msra.mxu0 0.0
        %805 = vmatprep.subr.mxu0 0.0
        %806 = vmatpush2.msra.mxu0 0.0
        %807 = vmatprep.subr.mxu0 0.0
        %808 = vmatpush2.msra.mxu0 0.0
        %809 = vmatprep.subr.mxu0 0.0
        %810 = vmatpush2.msra.mxu0 0.0
        %811 = vmatprep.mubr.f32.mxu0 0.0
        %812 = vmatmul.mubr.f32.gmra.mxu0 %v745
        %v813 = vpop.f32.mrf.mxu0
        %v814 = vadd.f32 %v742, %v813
        %v815 = vpop.f32.mrf.mxu0
        %v816 = vadd.f32 %v742, %v815
        %817 = vdwg.mxu0
        %v818 = vld [vmem:[%s5] sm:$0xff]
        %v819 = vld [vmem:[%s5 + $0x8] sm:$0xff]
        %v820 = vld [vmem:[%s6] sm:$0xff]
        %v821 = vld [vmem:[%s6 + $0x8] sm:$0xff]
        %823 = vset.pattern.permute.xlu0 0
        %824 = vperm.xlu0 %823, %v820
        %v825 = vpop.permute.xlu0 %824
        %828 = vset.pattern.permute.xlu0 0
        %829 = vperm.xlu0 %828, %v821
        %v830 = vpop.permute.xlu0 %829
        %v833 = vsel %vm415, %v818, 0
        %v836 = vsel %vm415, %v819, 0
        %838 = vmatprep.subr.mxu0 0.0
        %839 = vmatpush1.msra.mxu0 0.0
        %840 = vmatprep.subr.mxu0 0.0
        %841 = vmatpush1.msra.mxu0 0.0
        %842 = vmatprep.subr.mxu0 0.0
        %843 = vmatpush1.msra.mxu0 0.0
        %844 = vmatprep.subr.mxu0 0.0
        %845 = vmatpush1.msra.mxu0 0.0
        %846 = vmatprep.subr.mxu0 0.0
        %847 = vmatpush1.msra.mxu0 0.0
        %848 = vmatprep.subr.mxu0 0.0
        %849 = vmatpush1.msra.mxu0 0.0
        %850 = vmatprep.subr.mxu0 0.0
        %851 = vmatpush1.msra.mxu0 0.0
        %852 = vmatprep.subr.mxu0 0.0
        %853 = vmatpush1.msra.mxu0 0.0
        %854 = vmatprep.subr.mxu0 0.0
        %855 = vmatpush1.msra.mxu0 0.0
        %856 = vmatprep.subr.mxu0 0.0
        %857 = vmatpush1.msra.mxu0 0.0
        %858 = vmatprep.subr.mxu0 0.0
        %859 = vmatpush1.msra.mxu0 0.0
        %860 = vmatprep.subr.mxu0 0.0
        %861 = vmatpush1.msra.mxu0 0.0
        %862 = vmatprep.subr.mxu0 0.0
        %863 = vmatpush1.msra.mxu0 0.0
        %864 = vmatprep.subr.mxu0 0.0
        %865 = vmatpush1.msra.mxu0 0.0
        %866 = vmatprep.subr.mxu0 %v341
        %867 = vmatpush1.msra.mxu0 %v340
        %868 = vmatprep.subr.mxu0 %v339
        %869 = vmatpush1.msra.mxu0 %v338
        %870 = vmatprep.subr.mxu0 0.0
        %871 = vmatpush2.msra.mxu0 0.0
        %872 = vmatprep.subr.mxu0 0.0
        %873 = vmatpush2.msra.mxu0 0.0
        %874 = vmatprep.subr.mxu0 0.0
        %875 = vmatpush2.msra.mxu0 0.0
        %876 = vmatprep.subr.mxu0 0.0
        %877 = vmatpush2.msra.mxu0 0.0
        %878 = vmatprep.subr.mxu0 0.0
        %879 = vmatpush2.msra.mxu0 0.0
        %880 = vmatprep.subr.mxu0 0.0
        %881 = vmatpush2.msra.mxu0 0.0
        %882 = vmatprep.subr.mxu0 0.0
        %883 = vmatpush2.msra.mxu0 0.0
        %884 = vmatprep.subr.mxu0 0.0
        %885 = vmatpush2.msra.mxu0 0.0
        %886 = vmatprep.subr.mxu0 0.0
        %887 = vmatpush2.msra.mxu0 0.0
        %888 = vmatprep.subr.mxu0 0.0
        %889 = vmatpush2.msra.mxu0 0.0
        %890 = vmatprep.subr.mxu0 0.0
        %891 = vmatpush2.msra.mxu0 0.0
        %892 = vmatprep.subr.mxu0 0.0
        %893 = vmatpush2.msra.mxu0 0.0
        %894 = vmatprep.subr.mxu0 0.0
        %895 = vmatpush2.msra.mxu0 0.0
        %896 = vmatprep.subr.mxu0 0.0
        %897 = vmatpush2.msra.mxu0 0.0
        %898 = vmatprep.subr.mxu0 0.0
        %899 = vmatpush2.msra.mxu0 0.0
        %900 = vmatprep.subr.mxu0 0.0
        %901 = vmatpush2.msra.mxu0 0.0
        %902 = vmatprep.mubr.f32.mxu0 0.0
        %903 = vmatmul.mubr.f32.gmra.mxu0 %v833
        %v904 = vpop.f32.mrf.mxu0
        %v905 = vadd.f32 %v825, %v904
        %v906 = vpop.f32.mrf.mxu0
        %v907 = vadd.f32 %v825, %v906
        %908 = vmatprep.mubr.f32.mxu0 0.0
        %909 = vmatmul.mubr.f32.gmra.mxu0 %v836
        %v910 = vpop.f32.mrf.mxu0
        %v911 = vadd.f32 %v830, %v910
        %v912 = vpop.f32.mrf.mxu0
        %v913 = vadd.f32 %v830, %v912
        %914 = vdwg.mxu0
        %vm915 = vcmask 15360
        %v917 = vsel %vm915, %v579, 0
        %v920 = vsel %vm915, %v584, 0
        %v923 = vsel %vm915, %v589, 0
        %v926 = vsel %vm915, %v594, 0
        %v929 = vsel %vm915, %v599, 0
        %v932 = vsel %vm915, %v604, 0
        %v935 = vsel %vm915, %v609, 0
        %v938 = vsel %vm915, %v614, 0
        %v941 = vsel %vm915, %v619, 0
        %v944 = vsel %vm915, %v624, 0
        %v947 = vsel %vm915, %v629, 0
        %v950 = vsel %vm915, %v634, 0
        %v953 = vsel %vm915, %v639, 0
        %v956 = vsel %vm915, %v644, 0
        %v959 = vsel %vm915, %v649, 0
        %v962 = vsel %vm915, %v654, 0
        %v965 = vsel %vm915, %v659, 0
        %v968 = vsel %vm915, %v664, 0
        %v971 = vsel %vm915, %v669, 0
        %v974 = vsel %vm915, %v674, 0
        %v977 = vsel %vm915, %v679, 0
        %v980 = vsel %vm915, %v684, 0
        %v983 = vsel %vm915, %v689, 0
        %v986 = vsel %vm915, %v694, 0
        %v989 = vsel %vm915, %v699, 0
        %v992 = vsel %vm915, %v704, 0
        %v995 = vsel %vm915, %v709, 0
        %v998 = vsel %vm915, %v714, 0
        %v1001 = vsel %vm915, %v719, 0
        %v1004 = vsel %vm915, %v724, 0
        %v1007 = vsel %vm915, %v729, 0
        %v1010 = vsel %vm915, %v734, 0
        %vm1012 = vcmask 1041408
        %v1014 = vsel %vm1012, %v814, 0
        %v1017 = vsel %vm1012, %v816, 0
        %1019 = vmatprep.subr.mxu0 0.0
        %1020 = vmatpush1.msra.mxu0 0.0
        %1021 = vmatprep.subr.mxu0 0.0
        %1022 = vmatpush1.msra.mxu0 0.0
        %1023 = vmatprep.subr.mxu0 0.0
        %1024 = vmatpush1.msra.mxu0 0.0
        %1025 = vmatprep.subr.mxu0 0.0
        %1026 = vmatpush1.msra.mxu0 0.0
        %1027 = vmatprep.subr.mxu0 0.0
        %1028 = vmatpush1.msra.mxu0 0.0
        %1029 = vmatprep.subr.mxu0 0.0
        %1030 = vmatpush1.msra.mxu0 0.0
        %1031 = vmatprep.subr.mxu0 0.0
        %1032 = vmatpush1.msra.mxu0 0.0
        %1033 = vmatprep.subr.mxu0 0.0
        %1034 = vmatpush1.msra.mxu0 0.0
        %1035 = vmatprep.subr.mxu0 0.0
        %1036 = vmatpush1.msra.mxu0 0.0
        %1037 = vmatprep.subr.mxu0 0.0
        %1038 = vmatpush1.msra.mxu0 0.0
        %1039 = vmatprep.subr.mxu0 0.0
        %1040 = vmatpush1.msra.mxu0 0.0
        %1041 = vmatprep.subr.mxu0 0.0
        %1042 = vmatpush1.msra.mxu0 0.0
        %1043 = vmatprep.subr.mxu0 0.0
        %1044 = vmatpush1.msra.mxu0 0.0
        %1045 = vmatprep.subr.mxu0 0.0
        %1046 = vmatpush1.msra.mxu0 0.0
        %1047 = vmatprep.subr.mxu0 0.0
        %1048 = vmatpush1.msra.mxu0 0.0
        %1049 = vmatprep.subr.mxu0 %v1017
        %1050 = vmatpush1.msra.mxu0 %v1014
        %1051 = vmatprep.subr.mxu0 0.0
        %1052 = vmatpush2.msra.mxu0 0.0
        %1053 = vmatprep.subr.mxu0 0.0
        %1054 = vmatpush2.msra.mxu0 0.0
        %1055 = vmatprep.subr.mxu0 0.0
        %1056 = vmatpush2.msra.mxu0 0.0
        %1057 = vmatprep.subr.mxu0 0.0
        %1058 = vmatpush2.msra.mxu0 0.0
        %1059 = vmatprep.subr.mxu0 0.0
        %1060 = vmatpush2.msra.mxu0 0.0
        %1061 = vmatprep.subr.mxu0 0.0
        %1062 = vmatpush2.msra.mxu0 0.0
        %1063 = vmatprep.subr.mxu0 0.0
        %1064 = vmatpush2.msra.mxu0 0.0
        %1065 = vmatprep.subr.mxu0 0.0
        %1066 = vmatpush2.msra.mxu0 0.0
        %1067 = vmatprep.subr.mxu0 0.0
        %1068 = vmatpush2.msra.mxu0 0.0
        %1069 = vmatprep.subr.mxu0 0.0
        %1070 = vmatpush2.msra.mxu0 0.0
        %1071 = vmatprep.subr.mxu0 0.0
        %1072 = vmatpush2.msra.mxu0 0.0
        %1073 = vmatprep.subr.mxu0 0.0
        %1074 = vmatpush2.msra.mxu0 0.0
        %1075 = vmatprep.subr.mxu0 0.0
        %1076 = vmatpush2.msra.mxu0 0.0
        %1077 = vmatprep.subr.mxu0 0.0
        %1078 = vmatpush2.msra.mxu0 0.0
        %1079 = vmatprep.subr.mxu0 0.0
        %1080 = vmatpush2.msra.mxu0 0.0
        %1081 = vmatprep.subr.mxu0 0.0
        %1082 = vmatpush2.msra.mxu0 0.0
        %1083 = vmatprep.mubr.f32.mxu0 0.0
        %1084 = vmatmul.mubr.f32.gmra.mxu0 %v917
        %v1085 = vpop.f32.mrf.mxu0
        %v1086 = vadd.f32 0.0, %v1085
        %v1087 = vpop.f32.mrf.mxu0
        %v1088 = vadd.f32 0.0, %v1087
        %1089 = vmatprep.mubr.f32.mxu0 0.0
        %1090 = vmatmul.mubr.f32.gmra.mxu0 %v920
        %v1091 = vpop.f32.mrf.mxu0
        %v1092 = vadd.f32 0.0, %v1091
        %v1093 = vpop.f32.mrf.mxu0
        %v1094 = vadd.f32 0.0, %v1093
        %1095 = vmatprep.mubr.f32.mxu0 0.0
        %1096 = vmatmul.mubr.f32.gmra.mxu0 %v923
        %v1097 = vpop.f32.mrf.mxu0
        %v1098 = vadd.f32 0.0, %v1097
        %v1099 = vpop.f32.mrf.mxu0
        %v1100 = vadd.f32 0.0, %v1099
        %1101 = vmatprep.mubr.f32.mxu0 0.0
        %1102 = vmatmul.mubr.f32.gmra.mxu0 %v926
        %v1103 = vpop.f32.mrf.mxu0
        %v1104 = vadd.f32 0.0, %v1103
        %v1105 = vpop.f32.mrf.mxu0
        %v1106 = vadd.f32 0.0, %v1105
        %1107 = vmatprep.mubr.f32.mxu0 0.0
        %1108 = vmatmul.mubr.f32.gmra.mxu0 %v929
        %v1109 = vpop.f32.mrf.mxu0
        %v1110 = vadd.f32 0.0, %v1109
        %v1111 = vpop.f32.mrf.mxu0
        %v1112 = vadd.f32 0.0, %v1111
        %1113 = vmatprep.mubr.f32.mxu0 0.0
        %1114 = vmatmul.mubr.f32.gmra.mxu0 %v932
        %v1115 = vpop.f32.mrf.mxu0
        %v1116 = vadd.f32 0.0, %v1115
        %v1117 = vpop.f32.mrf.mxu0
        %v1118 = vadd.f32 0.0, %v1117
        %1119 = vmatprep.mubr.f32.mxu0 0.0
        %1120 = vmatmul.mubr.f32.gmra.mxu0 %v935
        %v1121 = vpop.f32.mrf.mxu0
        %v1122 = vadd.f32 0.0, %v1121
        %v1123 = vpop.f32.mrf.mxu0
        %v1124 = vadd.f32 0.0, %v1123
        %1125 = vmatprep.mubr.f32.mxu0 0.0
        %1126 = vmatmul.mubr.f32.gmra.mxu0 %v938
        %v1127 = vpop.f32.mrf.mxu0
        %v1128 = vadd.f32 0.0, %v1127
        %v1129 = vpop.f32.mrf.mxu0
        %v1130 = vadd.f32 0.0, %v1129
        %1131 = vmatprep.mubr.f32.mxu0 0.0
        %1132 = vmatmul.mubr.f32.gmra.mxu0 %v941
        %v1133 = vpop.f32.mrf.mxu0
        %v1134 = vadd.f32 0.0, %v1133
        %v1135 = vpop.f32.mrf.mxu0
        %v1136 = vadd.f32 0.0, %v1135
        %1137 = vmatprep.mubr.f32.mxu0 0.0
        %1138 = vmatmul.mubr.f32.gmra.mxu0 %v944
        %v1139 = vpop.f32.mrf.mxu0
        %v1140 = vadd.f32 0.0, %v1139
        %v1141 = vpop.f32.mrf.mxu0
        %v1142 = vadd.f32 0.0, %v1141
        %1143 = vmatprep.mubr.f32.mxu0 0.0
        %1144 = vmatmul.mubr.f32.gmra.mxu0 %v947
        %v1145 = vpop.f32.mrf.mxu0
        %v1146 = vadd.f32 0.0, %v1145
        %v1147 = vpop.f32.mrf.mxu0
        %v1148 = vadd.f32 0.0, %v1147
        %1149 = vmatprep.mubr.f32.mxu0 0.0
        %1150 = vmatmul.mubr.f32.gmra.mxu0 %v950
        %v1151 = vpop.f32.mrf.mxu0
        %v1152 = vadd.f32 0.0, %v1151
        %v1153 = vpop.f32.mrf.mxu0
        %v1154 = vadd.f32 0.0, %v1153
        %1155 = vmatprep.mubr.f32.mxu0 0.0
        %1156 = vmatmul.mubr.f32.gmra.mxu0 %v953
        %v1157 = vpop.f32.mrf.mxu0
        %v1158 = vadd.f32 0.0, %v1157
        %v1159 = vpop.f32.mrf.mxu0
        %v1160 = vadd.f32 0.0, %v1159
        %1161 = vmatprep.mubr.f32.mxu0 0.0
        %1162 = vmatmul.mubr.f32.gmra.mxu0 %v956
        %v1163 = vpop.f32.mrf.mxu0
        %v1164 = vadd.f32 0.0, %v1163
        %v1165 = vpop.f32.mrf.mxu0
        %v1166 = vadd.f32 0.0, %v1165
        %1167 = vmatprep.mubr.f32.mxu0 0.0
        %1168 = vmatmul.mubr.f32.gmra.mxu0 %v959
        %v1169 = vpop.f32.mrf.mxu0
        %v1170 = vadd.f32 0.0, %v1169
        %v1171 = vpop.f32.mrf.mxu0
        %v1172 = vadd.f32 0.0, %v1171
        %1173 = vmatprep.mubr.f32.mxu0 0.0
        %1174 = vmatmul.mubr.f32.gmra.mxu0 %v962
        %v1175 = vpop.f32.mrf.mxu0
        %v1176 = vadd.f32 0.0, %v1175
        %v1177 = vpop.f32.mrf.mxu0
        %v1178 = vadd.f32 0.0, %v1177
        %1179 = vmatprep.mubr.f32.mxu0 0.0
        %1180 = vmatmul.mubr.f32.gmra.mxu0 %v965
        %v1181 = vpop.f32.mrf.mxu0
        %v1182 = vadd.f32 0.0, %v1181
        %v1183 = vpop.f32.mrf.mxu0
        %v1184 = vadd.f32 0.0, %v1183
        %1185 = vmatprep.mubr.f32.mxu0 0.0
        %1186 = vmatmul.mubr.f32.gmra.mxu0 %v968
        %v1187 = vpop.f32.mrf.mxu0
        %v1188 = vadd.f32 0.0, %v1187
        %v1189 = vpop.f32.mrf.mxu0
        %v1190 = vadd.f32 0.0, %v1189
        %1191 = vmatprep.mubr.f32.mxu0 0.0
        %1192 = vmatmul.mubr.f32.gmra.mxu0 %v971
        %v1193 = vpop.f32.mrf.mxu0
        %v1194 = vadd.f32 0.0, %v1193
        %v1195 = vpop.f32.mrf.mxu0
        %v1196 = vadd.f32 0.0, %v1195
        %1197 = vmatprep.mubr.f32.mxu0 0.0
        %1198 = vmatmul.mubr.f32.gmra.mxu0 %v974
        %v1199 = vpop.f32.mrf.mxu0
        %v1200 = vadd.f32 0.0, %v1199
        %v1201 = vpop.f32.mrf.mxu0
        %v1202 = vadd.f32 0.0, %v1201
        %1203 = vmatprep.mubr.f32.mxu0 0.0
        %1204 = vmatmul.mubr.f32.gmra.mxu0 %v977
        %v1205 = vpop.f32.mrf.mxu0
        %v1206 = vadd.f32 0.0, %v1205
        %v1207 = vpop.f32.mrf.mxu0
        %v1208 = vadd.f32 0.0, %v1207
        %1209 = vmatprep.mubr.f32.mxu0 0.0
        %1210 = vmatmul.mubr.f32.gmra.mxu0 %v980
        %v1211 = vpop.f32.mrf.mxu0
        %v1212 = vadd.f32 0.0, %v1211
        %v1213 = vpop.f32.mrf.mxu0
        %v1214 = vadd.f32 0.0, %v1213
        %1215 = vmatprep.mubr.f32.mxu0 0.0
        %1216 = vmatmul.mubr.f32.gmra.mxu0 %v983
        %v1217 = vpop.f32.mrf.mxu0
        %v1218 = vadd.f32 0.0, %v1217
        %v1219 = vpop.f32.mrf.mxu0
        %v1220 = vadd.f32 0.0, %v1219
        %1221 = vmatprep.mubr.f32.mxu0 0.0
        %1222 = vmatmul.mubr.f32.gmra.mxu0 %v986
        %v1223 = vpop.f32.mrf.mxu0
        %v1224 = vadd.f32 0.0, %v1223
        %v1225 = vpop.f32.mrf.mxu0
        %v1226 = vadd.f32 0.0, %v1225
        %1227 = vmatprep.mubr.f32.mxu0 0.0
        %1228 = vmatmul.mubr.f32.gmra.mxu0 %v989
        %v1229 = vpop.f32.mrf.mxu0
        %v1230 = vadd.f32 0.0, %v1229
        %v1231 = vpop.f32.mrf.mxu0
        %v1232 = vadd.f32 0.0, %v1231
        %1233 = vmatprep.mubr.f32.mxu0 0.0
        %1234 = vmatmul.mubr.f32.gmra.mxu0 %v992
        %v1235 = vpop.f32.mrf.mxu0
        %v1236 = vadd.f32 0.0, %v1235
        %v1237 = vpop.f32.mrf.mxu0
        %v1238 = vadd.f32 0.0, %v1237
        %1239 = vmatprep.mubr.f32.mxu0 0.0
        %1240 = vmatmul.mubr.f32.gmra.mxu0 %v995
        %v1241 = vpop.f32.mrf.mxu0
        %v1242 = vadd.f32 0.0, %v1241
        %v1243 = vpop.f32.mrf.mxu0
        %v1244 = vadd.f32 0.0, %v1243
        %1245 = vmatprep.mubr.f32.mxu0 0.0
        %1246 = vmatmul.mubr.f32.gmra.mxu0 %v998
        %v1247 = vpop.f32.mrf.mxu0
        %v1248 = vadd.f32 0.0, %v1247
        %v1249 = vpop.f32.mrf.mxu0
        %v1250 = vadd.f32 0.0, %v1249
        %1251 = vmatprep.mubr.f32.mxu0 0.0
        %1252 = vmatmul.mubr.f32.gmra.mxu0 %v1001
        %v1253 = vpop.f32.mrf.mxu0
        %v1254 = vadd.f32 0.0, %v1253
        %v1255 = vpop.f32.mrf.mxu0
        %v1256 = vadd.f32 0.0, %v1255
        %1257 = vmatprep.mubr.f32.mxu0 0.0
        %1258 = vmatmul.mubr.f32.gmra.mxu0 %v1004
        %v1259 = vpop.f32.mrf.mxu0
        %v1260 = vadd.f32 0.0, %v1259
        %v1261 = vpop.f32.mrf.mxu0
        %v1262 = vadd.f32 0.0, %v1261
        %1263 = vmatprep.mubr.f32.mxu0 0.0
        %1264 = vmatmul.mubr.f32.gmra.mxu0 %v1007
        %v1265 = vpop.f32.mrf.mxu0
        %v1266 = vadd.f32 0.0, %v1265
        %v1267 = vpop.f32.mrf.mxu0
        %v1268 = vadd.f32 0.0, %v1267
        %1269 = vmatprep.mubr.f32.mxu0 0.0
        %1270 = vmatmul.mubr.f32.gmra.mxu0 %v1010
        %v1271 = vpop.f32.mrf.mxu0
        %v1272 = vadd.f32 0.0, %v1271
        %v1273 = vpop.f32.mrf.mxu0
        %v1274 = vadd.f32 0.0, %v1273
        %1275 = vdwg.mxu0
        %v1276 = vmax.f32 %v1086, %v1088
        %1277 = vmax.xlane.f32.xlu0 %v1276
        %v1278 = vpop.xlane.xlu0 %1277
        %v1279 = vmax.f32 %v1092, %v1094
        %1280 = vmax.xlane.f32.xlu0 %v1279
        %v1281 = vpop.xlane.xlu0 %1280
        %v1282 = vmax.f32 %v1098, %v1100
        %1283 = vmax.xlane.f32.xlu0 %v1282
        %v1284 = vpop.xlane.xlu0 %1283
        %v1285 = vmax.f32 %v1104, %v1106
        %1286 = vmax.xlane.f32.xlu0 %v1285
        %v1287 = vpop.xlane.xlu0 %1286
        %v1288 = vmax.f32 %v1110, %v1112
        %1289 = vmax.xlane.f32.xlu0 %v1288
        %v1290 = vpop.xlane.xlu0 %1289
        %v1291 = vmax.f32 %v1116, %v1118
        %1292 = vmax.xlane.f32.xlu0 %v1291
        %v1293 = vpop.xlane.xlu0 %1292
        %v1294 = vmax.f32 %v1122, %v1124
        %1295 = vmax.xlane.f32.xlu0 %v1294
        %v1296 = vpop.xlane.xlu0 %1295
        %v1297 = vmax.f32 %v1128, %v1130
        %1298 = vmax.xlane.f32.xlu0 %v1297
        %v1299 = vpop.xlane.xlu0 %1298
        %v1300 = vmax.f32 %v1134, %v1136
        %1301 = vmax.xlane.f32.xlu0 %v1300
        %v1302 = vpop.xlane.xlu0 %1301
        %v1303 = vmax.f32 %v1140, %v1142
        %1304 = vmax.xlane.f32.xlu0 %v1303
        %v1305 = vpop.xlane.xlu0 %1304
        %v1306 = vmax.f32 %v1146, %v1148
        %1307 = vmax.xlane.f32.xlu0 %v1306
        %v1308 = vpop.xlane.xlu0 %1307
        %v1309 = vmax.f32 %v1152, %v1154
        %1310 = vmax.xlane.f32.xlu0 %v1309
        %v1311 = vpop.xlane.xlu0 %1310
        %v1312 = vmax.f32 %v1158, %v1160
        %1313 = vmax.xlane.f32.xlu0 %v1312
        %v1314 = vpop.xlane.xlu0 %1313
        %v1315 = vmax.f32 %v1164, %v1166
        %1316 = vmax.xlane.f32.xlu0 %v1315
        %v1317 = vpop.xlane.xlu0 %1316
        %v1318 = vmax.f32 %v1170, %v1172
        %1319 = vmax.xlane.f32.xlu0 %v1318
        %v1320 = vpop.xlane.xlu0 %1319
        %v1321 = vmax.f32 %v1176, %v1178
        %1322 = vmax.xlane.f32.xlu0 %v1321
        %v1323 = vpop.xlane.xlu0 %1322
        %v1324 = vmax.f32 %v1182, %v1184
        %1325 = vmax.xlane.f32.xlu0 %v1324
        %v1326 = vpop.xlane.xlu0 %1325
        %v1327 = vmax.f32 %v1188, %v1190
        %1328 = vmax.xlane.f32.xlu0 %v1327
        %v1329 = vpop.xlane.xlu0 %1328
        %v1330 = vmax.f32 %v1194, %v1196
        %1331 = vmax.xlane.f32.xlu0 %v1330
        %v1332 = vpop.xlane.xlu0 %1331
        %v1333 = vmax.f32 %v1200, %v1202
        %1334 = vmax.xlane.f32.xlu0 %v1333
        %v1335 = vpop.xlane.xlu0 %1334
        %v1336 = vmax.f32 %v1206, %v1208
        %1337 = vmax.xlane.f32.xlu0 %v1336
        %v1338 = vpop.xlane.xlu0 %1337
        %v1339 = vmax.f32 %v1212, %v1214
        %1340 = vmax.xlane.f32.xlu0 %v1339
        %v1341 = vpop.xlane.xlu0 %1340
        %v1342 = vmax.f32 %v1218, %v1220
        %1343 = vmax.xlane.f32.xlu0 %v1342
        %v1344 = vpop.xlane.xlu0 %1343
        %v1345 = vmax.f32 %v1224, %v1226
        %1346 = vmax.xlane.f32.xlu0 %v1345
        %v1347 = vpop.xlane.xlu0 %1346
        %v1348 = vmax.f32 %v1230, %v1232
        %1349 = vmax.xlane.f32.xlu0 %v1348
        %v1350 = vpop.xlane.xlu0 %1349
        %v1351 = vmax.f32 %v1236, %v1238
        %1352 = vmax.xlane.f32.xlu0 %v1351
        %v1353 = vpop.xlane.xlu0 %1352
        %v1354 = vmax.f32 %v1242, %v1244
        %1355 = vmax.xlane.f32.xlu0 %v1354
        %v1356 = vpop.xlane.xlu0 %1355
        %v1357 = vmax.f32 %v1248, %v1250
        %1358 = vmax.xlane.f32.xlu0 %v1357
        %v1359 = vpop.xlane.xlu0 %1358
        %v1360 = vmax.f32 %v1254, %v1256
        %1361 = vmax.xlane.f32.xlu0 %v1360
        %v1362 = vpop.xlane.xlu0 %1361
        %v1363 = vmax.f32 %v1260, %v1262
        %1364 = vmax.xlane.f32.xlu0 %v1363
        %v1365 = vpop.xlane.xlu0 %1364
        %v1366 = vmax.f32 %v1266, %v1268
        %1367 = vmax.xlane.f32.xlu0 %v1366
        %v1368 = vpop.xlane.xlu0 %1367
        %v1369 = vmax.f32 %v1272, %v1274
        %1370 = vmax.xlane.f32.xlu0 %v1369
        %v1371 = vpop.xlane.xlu0 %1370
        %v1372 = vsub.f32 %v1086, %v1278
        %v1373 = vsub.f32 %v1088, %v1278
        %v1374 = vsub.f32 %v1092, %v1281
        %v1375 = vsub.f32 %v1094, %v1281
        %v1376 = vsub.f32 %v1098, %v1284
        %v1377 = vsub.f32 %v1100, %v1284
        %v1378 = vsub.f32 %v1104, %v1287
        %v1379 = vsub.f32 %v1106, %v1287
        %v1380 = vsub.f32 %v1110, %v1290
        %v1381 = vsub.f32 %v1112, %v1290
        %v1382 = vsub.f32 %v1116, %v1293
        %v1383 = vsub.f32 %v1118, %v1293
        %v1384 = vsub.f32 %v1122, %v1296
        %v1385 = vsub.f32 %v1124, %v1296
        %v1386 = vsub.f32 %v1128, %v1299
        %v1387 = vsub.f32 %v1130, %v1299
        %v1388 = vsub.f32 %v1134, %v1302
        %v1389 = vsub.f32 %v1136, %v1302
        %v1390 = vsub.f32 %v1140, %v1305
        %v1391 = vsub.f32 %v1142, %v1305
        %v1392 = vsub.f32 %v1146, %v1308
        %v1393 = vsub.f32 %v1148, %v1308
        %v1394 = vsub.f32 %v1152, %v1311
        %v1395 = vsub.f32 %v1154, %v1311
        %v1396 = vsub.f32 %v1158, %v1314
        %v1397 = vsub.f32 %v1160, %v1314
        %v1398 = vsub.f32 %v1164, %v1317
        %v1399 = vsub.f32 %v1166, %v1317
        %v1400 = vsub.f32 %v1170, %v1320
        %v1401 = vsub.f32 %v1172, %v1320
        %v1402 = vsub.f32 %v1176, %v1323
        %v1403 = vsub.f32 %v1178, %v1323
        %v1404 = vsub.f32 %v1182, %v1326
        %v1405 = vsub.f32 %v1184, %v1326
        %v1406 = vsub.f32 %v1188, %v1329
        %v1407 = vsub.f32 %v1190, %v1329
        %v1408 = vsub.f32 %v1194, %v1332
        %v1409 = vsub.f32 %v1196, %v1332
        %v1410 = vsub.f32 %v1200, %v1335
        %v1411 = vsub.f32 %v1202, %v1335
        %v1412 = vsub.f32 %v1206, %v1338
        %v1413 = vsub.f32 %v1208, %v1338
        %v1414 = vsub.f32 %v1212, %v1341
        %v1415 = vsub.f32 %v1214, %v1341
        %v1416 = vsub.f32 %v1218, %v1344
        %v1417 = vsub.f32 %v1220, %v1344
        %v1418 = vsub.f32 %v1224, %v1347
        %v1419 = vsub.f32 %v1226, %v1347
        %v1420 = vsub.f32 %v1230, %v1350
        %v1421 = vsub.f32 %v1232, %v1350
        %v1422 = vsub.f32 %v1236, %v1353
        %v1423 = vsub.f32 %v1238, %v1353
        %v1424 = vsub.f32 %v1242, %v1356
        %v1425 = vsub.f32 %v1244, %v1356
        %v1426 = vsub.f32 %v1248, %v1359
        %v1427 = vsub.f32 %v1250, %v1359
        %v1428 = vsub.f32 %v1254, %v1362
        %v1429 = vsub.f32 %v1256, %v1362
        %v1430 = vsub.f32 %v1260, %v1365
        %v1431 = vsub.f32 %v1262, %v1365
        %v1432 = vsub.f32 %v1266, %v1368
        %v1433 = vsub.f32 %v1268, %v1368
        %v1434 = vsub.f32 %v1272, %v1371
        %v1435 = vsub.f32 %v1274, %v1371
        %v1436 = vmul.f32 %v1372, 1.442695
        %v1437 = vpow.pop %v1436
        %v1438 = vmul.f32 %v1373, 1.442695
        %v1439 = vpow.pop %v1438
        %v1440 = vmul.f32 %v1374, 1.442695
        %v1441 = vpow.pop %v1440
        %v1442 = vmul.f32 %v1375, 1.442695
        %v1443 = vpow.pop %v1442
        %v1444 = vmul.f32 %v1376, 1.442695
        %v1445 = vpow.pop %v1444
        %v1446 = vmul.f32 %v1377, 1.442695
        %v1447 = vpow.pop %v1446
        %v1448 = vmul.f32 %v1378, 1.442695
        %v1449 = vpow.pop %v1448
        %v1450 = vmul.f32 %v1379, 1.442695
        %v1451 = vpow.pop %v1450
        %v1452 = vmul.f32 %v1380, 1.442695
        %v1453 = vpow.pop %v1452
        %v1454 = vmul.f32 %v1381, 1.442695
        %v1455 = vpow.pop %v1454
        %v1456 = vmul.f32 %v1382, 1.442695
        %v1457 = vpow.pop %v1456
        %v1458 = vmul.f32 %v1383, 1.442695
        %v1459 = vpow.pop %v1458
        %v1460 = vmul.f32 %v1384, 1.442695
        %v1461 = vpow.pop %v1460
        %v1462 = vmul.f32 %v1385, 1.442695
        %v1463 = vpow.pop %v1462
        %v1464 = vmul.f32 %v1386, 1.442695
        %v1465 = vpow.pop %v1464
        %v1466 = vmul.f32 %v1387, 1.442695
        %v1467 = vpow.pop %v1466
        %v1468 = vmul.f32 %v1388, 1.442695
        %v1469 = vpow.pop %v1468
        %v1470 = vmul.f32 %v1389, 1.442695
        %v1471 = vpow.pop %v1470
        %v1472 = vmul.f32 %v1390, 1.442695
        %v1473 = vpow.pop %v1472
        %v1474 = vmul.f32 %v1391, 1.442695
        %v1475 = vpow.pop %v1474
        %v1476 = vmul.f32 %v1392, 1.442695
        %v1477 = vpow.pop %v1476
        %v1478 = vmul.f32 %v1393, 1.442695
        %v1479 = vpow.pop %v1478
        %v1480 = vmul.f32 %v1394, 1.442695
        %v1481 = vpow.pop %v1480
        %v1482 = vmul.f32 %v1395, 1.442695
        %v1483 = vpow.pop %v1482
        %v1484 = vmul.f32 %v1396, 1.442695
        %v1485 = vpow.pop %v1484
        %v1486 = vmul.f32 %v1397, 1.442695
        %v1487 = vpow.pop %v1486
        %v1488 = vmul.f32 %v1398, 1.442695
        %v1489 = vpow.pop %v1488
        %v1490 = vmul.f32 %v1399, 1.442695
        %v1491 = vpow.pop %v1490
        %v1492 = vmul.f32 %v1400, 1.442695
        %v1493 = vpow.pop %v1492
        %v1494 = vmul.f32 %v1401, 1.442695
        %v1495 = vpow.pop %v1494
        %v1496 = vmul.f32 %v1402, 1.442695
        %v1497 = vpow.pop %v1496
        %v1498 = vmul.f32 %v1403, 1.442695
        %v1499 = vpow.pop %v1498
        %v1500 = vmul.f32 %v1404, 1.442695
        %v1501 = vpow.pop %v1500
        %v1502 = vmul.f32 %v1405, 1.442695
        %v1503 = vpow.pop %v1502
        %v1504 = vmul.f32 %v1406, 1.442695
        %v1505 = vpow.pop %v1504
        %v1506 = vmul.f32 %v1407, 1.442695
        %v1507 = vpow.pop %v1506
        %v1508 = vmul.f32 %v1408, 1.442695
        %v1509 = vpow.pop %v1508
        %v1510 = vmul.f32 %v1409, 1.442695
        %v1511 = vpow.pop %v1510
        %v1512 = vmul.f32 %v1410, 1.442695
        %v1513 = vpow.pop %v1512
        %v1514 = vmul.f32 %v1411, 1.442695
        %v1515 = vpow.pop %v1514
        %v1516 = vmul.f32 %v1412, 1.442695
        %v1517 = vpow.pop %v1516
        %v1518 = vmul.f32 %v1413, 1.442695
        %v1519 = vpow.pop %v1518
        %v1520 = vmul.f32 %v1414, 1.442695
        %v1521 = vpow.pop %v1520
        %v1522 = vmul.f32 %v1415, 1.442695
        %v1523 = vpow.pop %v1522
        %v1524 = vmul.f32 %v1416, 1.442695
        %v1525 = vpow.pop %v1524
        %v1526 = vmul.f32 %v1417, 1.442695
        %v1527 = vpow.pop %v1526
        %v1528 = vmul.f32 %v1418, 1.442695
        %v1529 = vpow.pop %v1528
        %v1530 = vmul.f32 %v1419, 1.442695
        %v1531 = vpow.pop %v1530
        %v1532 = vmul.f32 %v1420, 1.442695
        %v1533 = vpow.pop %v1532
        %v1534 = vmul.f32 %v1421, 1.442695
        %v1535 = vpow.pop %v1534
        %v1536 = vmul.f32 %v1422, 1.442695
        %v1537 = vpow.pop %v1536
        %v1538 = vmul.f32 %v1423, 1.442695
        %v1539 = vpow.pop %v1538
        %v1540 = vmul.f32 %v1424, 1.442695
        %v1541 = vpow.pop %v1540
        %v1542 = vmul.f32 %v1425, 1.442695
        %v1543 = vpow.pop %v1542
        %v1544 = vmul.f32 %v1426, 1.442695
        %v1545 = vpow.pop %v1544
        %v1546 = vmul.f32 %v1427, 1.442695
        %v1547 = vpow.pop %v1546
        %v1548 = vmul.f32 %v1428, 1.442695
        %v1549 = vpow.pop %v1548
        %v1550 = vmul.f32 %v1429, 1.442695
        %v1551 = vpow.pop %v1550
        %v1552 = vmul.f32 %v1430, 1.442695
        %v1553 = vpow.pop %v1552
        %v1554 = vmul.f32 %v1431, 1.442695
        %v1555 = vpow.pop %v1554
        %v1556 = vmul.f32 %v1432, 1.442695
        %v1557 = vpow.pop %v1556
        %v1558 = vmul.f32 %v1433, 1.442695
        %v1559 = vpow.pop %v1558
        %v1560 = vmul.f32 %v1434, 1.442695
        %v1561 = vpow.pop %v1560
        %v1562 = vmul.f32 %v1435, 1.442695
        %v1563 = vpow.pop %v1562
        %v1564 = vadd.f32 %v1437, %v1439
        %1565 = vadd.xlane.f32.xlu0 %v1564
        %v1566 = vpop.xlane.xlu0 %1565
        %v1567 = vadd.f32 %v1441, %v1443
        %1568 = vadd.xlane.f32.xlu0 %v1567
        %v1569 = vpop.xlane.xlu0 %1568
        %v1570 = vadd.f32 %v1445, %v1447
        %1571 = vadd.xlane.f32.xlu0 %v1570
        %v1572 = vpop.xlane.xlu0 %1571
        %v1573 = vadd.f32 %v1449, %v1451
        %1574 = vadd.xlane.f32.xlu0 %v1573
        %v1575 = vpop.xlane.xlu0 %1574
        %v1576 = vadd.f32 %v1453, %v1455
        %1577 = vadd.xlane.f32.xlu0 %v1576
        %v1578 = vpop.xlane.xlu0 %1577
        %v1579 = vadd.f32 %v1457, %v1459
        %1580 = vadd.xlane.f32.xlu0 %v1579
        %v1581 = vpop.xlane.xlu0 %1580
        %v1582 = vadd.f32 %v1461, %v1463
        %1583 = vadd.xlane.f32.xlu0 %v1582
        %v1584 = vpop.xlane.xlu0 %1583
        %v1585 = vadd.f32 %v1465, %v1467
        %1586 = vadd.xlane.f32.xlu0 %v1585
        %v1587 = vpop.xlane.xlu0 %1586
        %v1588 = vadd.f32 %v1469, %v1471
        %1589 = vadd.xlane.f32.xlu0 %v1588
        %v1590 = vpop.xlane.xlu0 %1589
        %v1591 = vadd.f32 %v1473, %v1475
        %1592 = vadd.xlane.f32.xlu0 %v1591
        %v1593 = vpop.xlane.xlu0 %1592
        %v1594 = vadd.f32 %v1477, %v1479
        %1595 = vadd.xlane.f32.xlu0 %v1594
        %v1596 = vpop.xlane.xlu0 %1595
        %v1597 = vadd.f32 %v1481, %v1483
        %1598 = vadd.xlane.f32.xlu0 %v1597
        %v1599 = vpop.xlane.xlu0 %1598
        %v1600 = vadd.f32 %v1485, %v1487
        %1601 = vadd.xlane.f32.xlu0 %v1600
        %v1602 = vpop.xlane.xlu0 %1601
        %v1603 = vadd.f32 %v1489, %v1491
        %1604 = vadd.xlane.f32.xlu0 %v1603
        %v1605 = vpop.xlane.xlu0 %1604
        %v1606 = vadd.f32 %v1493, %v1495
        %1607 = vadd.xlane.f32.xlu0 %v1606
        %v1608 = vpop.xlane.xlu0 %1607
        %v1609 = vadd.f32 %v1497, %v1499
        %1610 = vadd.xlane.f32.xlu0 %v1609
        %v1611 = vpop.xlane.xlu0 %1610
        %v1612 = vadd.f32 %v1501, %v1503
        %1613 = vadd.xlane.f32.xlu0 %v1612
        %v1614 = vpop.xlane.xlu0 %1613
        %v1615 = vadd.f32 %v1505, %v1507
        %1616 = vadd.xlane.f32.xlu0 %v1615
        %v1617 = vpop.xlane.xlu0 %1616
        %v1618 = vadd.f32 %v1509, %v1511
        %1619 = vadd.xlane.f32.xlu0 %v1618
        %v1620 = vpop.xlane.xlu0 %1619
        %v1621 = vadd.f32 %v1513, %v1515
        %1622 = vadd.xlane.f32.xlu0 %v1621
        %v1623 = vpop.xlane.xlu0 %1622
        %v1624 = vadd.f32 %v1517, %v1519
        %1625 = vadd.xlane.f32.xlu0 %v1624
        %v1626 = vpop.xlane.xlu0 %1625
        %v1627 = vadd.f32 %v1521, %v1523
        %1628 = vadd.xlane.f32.xlu0 %v1627
        %v1629 = vpop.xlane.xlu0 %1628
        %v1630 = vadd.f32 %v1525, %v1527
        %1631 = vadd.xlane.f32.xlu0 %v1630
        %v1632 = vpop.xlane.xlu0 %1631
        %v1633 = vadd.f32 %v1529, %v1531
        %1634 = vadd.xlane.f32.xlu0 %v1633
        %v1635 = vpop.xlane.xlu0 %1634
        %v1636 = vadd.f32 %v1533, %v1535
        %1637 = vadd.xlane.f32.xlu0 %v1636
        %v1638 = vpop.xlane.xlu0 %1637
        %v1639 = vadd.f32 %v1537, %v1539
        %1640 = vadd.xlane.f32.xlu0 %v1639
        %v1641 = vpop.xlane.xlu0 %1640
        %v1642 = vadd.f32 %v1541, %v1543
        %1643 = vadd.xlane.f32.xlu0 %v1642
        %v1644 = vpop.xlane.xlu0 %1643
        %v1645 = vadd.f32 %v1545, %v1547
        %1646 = vadd.xlane.f32.xlu0 %v1645
        %v1647 = vpop.xlane.xlu0 %1646
        %v1648 = vadd.f32 %v1549, %v1551
        %1649 = vadd.xlane.f32.xlu0 %v1648
        %v1650 = vpop.xlane.xlu0 %1649
        %v1651 = vadd.f32 %v1553, %v1555
        %1652 = vadd.xlane.f32.xlu0 %v1651
        %v1653 = vpop.xlane.xlu0 %1652
        %v1654 = vadd.f32 %v1557, %v1559
        %1655 = vadd.xlane.f32.xlu0 %v1654
        %v1656 = vpop.xlane.xlu0 %1655
        %v1657 = vadd.f32 %v1561, %v1563
        %1658 = vadd.xlane.f32.xlu0 %v1657
        %v1659 = vpop.xlane.xlu0 %1658
        %v1660 = vrcp.pop %v1566
        %v1661 = vmul.f32 %v1437, %v1660
        %v1662 = vmul.f32 %v1439, %v1660
        %v1663 = vrcp.pop %v1569
        %v1664 = vmul.f32 %v1441, %v1663
        %v1665 = vmul.f32 %v1443, %v1663
        %v1666 = vrcp.pop %v1572
        %v1667 = vmul.f32 %v1445, %v1666
        %v1668 = vmul.f32 %v1447, %v1666
        %v1669 = vrcp.pop %v1575
        %v1670 = vmul.f32 %v1449, %v1669
        %v1671 = vmul.f32 %v1451, %v1669
        %v1672 = vrcp.pop %v1578
        %v1673 = vmul.f32 %v1453, %v1672
        %v1674 = vmul.f32 %v1455, %v1672
        %v1675 = vrcp.pop %v1581
        %v1676 = vmul.f32 %v1457, %v1675
        %v1677 = vmul.f32 %v1459, %v1675
        %v1678 = vrcp.pop %v1584
        %v1679 = vmul.f32 %v1461, %v1678
        %v1680 = vmul.f32 %v1463, %v1678
        %v1681 = vrcp.pop %v1587
        %v1682 = vmul.f32 %v1465, %v1681
        %v1683 = vmul.f32 %v1467, %v1681
        %v1684 = vrcp.pop %v1590
        %v1685 = vmul.f32 %v1469, %v1684
        %v1686 = vmul.f32 %v1471, %v1684
        %v1687 = vrcp.pop %v1593
        %v1688 = vmul.f32 %v1473, %v1687
        %v1689 = vmul.f32 %v1475, %v1687
        %v1690 = vrcp.pop %v1596
        %v1691 = vmul.f32 %v1477, %v1690
        %v1692 = vmul.f32 %v1479, %v1690
        %v1693 = vrcp.pop %v1599
        %v1694 = vmul.f32 %v1481, %v1693
        %v1695 = vmul.f32 %v1483, %v1693
        %v1696 = vrcp.pop %v1602
        %v1697 = vmul.f32 %v1485, %v1696
        %v1698 = vmul.f32 %v1487, %v1696
        %v1699 = vrcp.pop %v1605
        %v1700 = vmul.f32 %v1489, %v1699
        %v1701 = vmul.f32 %v1491, %v1699
        %v1702 = vrcp.pop %v1608
        %v1703 = vmul.f32 %v1493, %v1702
        %v1704 = vmul.f32 %v1495, %v1702
        %v1705 = vrcp.pop %v1611
        %v1706 = vmul.f32 %v1497, %v1705
        %v1707 = vmul.f32 %v1499, %v1705
        %v1708 = vrcp.pop %v1614
        %v1709 = vmul.f32 %v1501, %v1708
        %v1710 = vmul.f32 %v1503, %v1708
        %v1711 = vrcp.pop %v1617
        %v1712 = vmul.f32 %v1505, %v1711
        %v1713 = vmul.f32 %v1507, %v1711
        %v1714 = vrcp.pop %v1620
        %v1715 = vmul.f32 %v1509, %v1714
        %v1716 = vmul.f32 %v1511, %v1714
        %v1717 = vrcp.pop %v1623
        %v1718 = vmul.f32 %v1513, %v1717
        %v1719 = vmul.f32 %v1515, %v1717
        %v1720 = vrcp.pop %v1626
        %v1721 = vmul.f32 %v1517, %v1720
        %v1722 = vmul.f32 %v1519, %v1720
        %v1723 = vrcp.pop %v1629
        %v1724 = vmul.f32 %v1521, %v1723
        %v1725 = vmul.f32 %v1523, %v1723
        %v1726 = vrcp.pop %v1632
        %v1727 = vmul.f32 %v1525, %v1726
        %v1728 = vmul.f32 %v1527, %v1726
        %v1729 = vrcp.pop %v1635
        %v1730 = vmul.f32 %v1529, %v1729
        %v1731 = vmul.f32 %v1531, %v1729
        %v1732 = vrcp.pop %v1638
        %v1733 = vmul.f32 %v1533, %v1732
        %v1734 = vmul.f32 %v1535, %v1732
        %v1735 = vrcp.pop %v1641
        %v1736 = vmul.f32 %v1537, %v1735
        %v1737 = vmul.f32 %v1539, %v1735
        %v1738 = vrcp.pop %v1644
        %v1739 = vmul.f32 %v1541, %v1738
        %v1740 = vmul.f32 %v1543, %v1738
        %v1741 = vrcp.pop %v1647
        %v1742 = vmul.f32 %v1545, %v1741
        %v1743 = vmul.f32 %v1547, %v1741
        %v1744 = vrcp.pop %v1650
        %v1745 = vmul.f32 %v1549, %v1744
        %v1746 = vmul.f32 %v1551, %v1744
        %v1747 = vrcp.pop %v1653
        %v1748 = vmul.f32 %v1553, %v1747
        %v1749 = vmul.f32 %v1555, %v1747
        %v1750 = vrcp.pop %v1656
        %v1751 = vmul.f32 %v1557, %v1750
        %v1752 = vmul.f32 %v1559, %v1750
        %v1753 = vrcp.pop %v1659
        %v1754 = vmul.f32 %v1561, %v1753
        %v1755 = vmul.f32 %v1563, %v1753
        %1756 = vmatprep.subr.mxu0 %v1707
        %1757 = vmatpush1.xpose.msra.mxu0 %v1706
        %1758 = vmatprep.subr.mxu0 %v1704
        %1759 = vmatpush1.xpose.msra.mxu0 %v1703
        %1760 = vmatprep.subr.mxu0 %v1701
        %1761 = vmatpush1.xpose.msra.mxu0 %v1700
        %1762 = vmatprep.subr.mxu0 %v1698
        %1763 = vmatpush1.xpose.msra.mxu0 %v1697
        %1764 = vmatprep.subr.mxu0 %v1695
        %1765 = vmatpush1.xpose.msra.mxu0 %v1694
        %1766 = vmatprep.subr.mxu0 %v1692
        %1767 = vmatpush1.xpose.msra.mxu0 %v1691
        %1768 = vmatprep.subr.mxu0 %v1689
        %1769 = vmatpush1.xpose.msra.mxu0 %v1688
        %1770 = vmatprep.subr.mxu0 %v1686
        %1771 = vmatpush1.xpose.msra.mxu0 %v1685
        %1772 = vmatprep.subr.mxu0 %v1683
        %1773 = vmatpush1.xpose.msra.mxu0 %v1682
        %1774 = vmatprep.subr.mxu0 %v1680
        %1775 = vmatpush1.xpose.msra.mxu0 %v1679
        %1776 = vmatprep.subr.mxu0 %v1677
        %1777 = vmatpush1.xpose.msra.mxu0 %v1676
        %1778 = vmatprep.subr.mxu0 %v1674
        %1779 = vmatpush1.xpose.msra.mxu0 %v1673
        %1780 = vmatprep.subr.mxu0 %v1671
        %1781 = vmatpush1.xpose.msra.mxu0 %v1670
        %1782 = vmatprep.subr.mxu0 %v1668
        %1783 = vmatpush1.xpose.msra.mxu0 %v1667
        %1784 = vmatprep.subr.mxu0 %v1665
        %1785 = vmatpush1.xpose.msra.mxu0 %v1664
        %1786 = vmatprep.subr.mxu0 %v1662
        %1787 = vmatpush1.xpose.msra.mxu0 %v1661
        %1788 = vmatprep.subr.mxu0 %v1755
        %1789 = vmatpush2.xpose.msra.mxu0 %v1754
        %1790 = vmatprep.subr.mxu0 %v1752
        %1791 = vmatpush2.xpose.msra.mxu0 %v1751
        %1792 = vmatprep.subr.mxu0 %v1749
        %1793 = vmatpush2.xpose.msra.mxu0 %v1748
        %1794 = vmatprep.subr.mxu0 %v1746
        %1795 = vmatpush2.xpose.msra.mxu0 %v1745
        %1796 = vmatprep.subr.mxu0 %v1743
        %1797 = vmatpush2.xpose.msra.mxu0 %v1742
        %1798 = vmatprep.subr.mxu0 %v1740
        %1799 = vmatpush2.xpose.msra.mxu0 %v1739
        %1800 = vmatprep.subr.mxu0 %v1737
        %1801 = vmatpush2.xpose.msra.mxu0 %v1736
        %1802 = vmatprep.subr.mxu0 %v1734
        %1803 = vmatpush2.xpose.msra.mxu0 %v1733
        %1804 = vmatprep.subr.mxu0 %v1731
        %1805 = vmatpush2.xpose.msra.mxu0 %v1730
        %1806 = vmatprep.subr.mxu0 %v1728
        %1807 = vmatpush2.xpose.msra.mxu0 %v1727
        %1808 = vmatprep.subr.mxu0 %v1725
        %1809 = vmatpush2.xpose.msra.mxu0 %v1724
        %1810 = vmatprep.subr.mxu0 %v1722
        %1811 = vmatpush2.xpose.msra.mxu0 %v1721
        %1812 = vmatprep.subr.mxu0 %v1719
        %1813 = vmatpush2.xpose.msra.mxu0 %v1718
        %1814 = vmatprep.subr.mxu0 %v1716
        %1815 = vmatpush2.xpose.msra.mxu0 %v1715
        %1816 = vmatprep.subr.mxu0 %v1713
        %1817 = vmatpush2.xpose.msra.mxu0 %v1712
        %1818 = vmatprep.subr.mxu0 %v1710
        %1819 = vmatpush2.xpose.msra.mxu0 %v1709
        %1820 = vmatprep.mubr.f32.mxu0 %v907
        %1821 = vmatmul.mubr.f32.gmra.mxu0 %v905
        %v1822 = vpop.f32.mrf.mxu0
        %v1823 = vadd.f32 0.0, %v1822
        %v1824 = vpop.f32.mrf.mxu0
        %v1825 = vadd.f32 0.0, %v1824
        %1826 = vmatprep.mubr.f32.mxu0 %v913
        %1827 = vmatmul.mubr.f32.gmra.mxu0 %v911
        %v1828 = vpop.f32.mrf.mxu0
        %v1829 = vadd.f32 0.0, %v1828
        %v1830 = vpop.f32.mrf.mxu0
        %v1831 = vadd.f32 0.0, %v1830
        %1832 = vdwg.mxu0
        %1833 = vmatprep.subr.mxu0 0.0
        %1834 = vmatpush1.xpose.msra.mxu0 0.0
        %1835 = vmatprep.subr.mxu0 0.0
        %1836 = vmatpush1.xpose.msra.mxu0 0.0
        %1837 = vmatprep.subr.mxu0 0.0
        %1838 = vmatpush1.xpose.msra.mxu0 0.0
        %1839 = vmatprep.subr.mxu0 0.0
        %1840 = vmatpush1.xpose.msra.mxu0 0.0
        %1841 = vmatprep.subr.mxu0 0.0
        %1842 = vmatpush1.xpose.msra.mxu0 0.0
        %1843 = vmatprep.subr.mxu0 0.0
        %1844 = vmatpush1.xpose.msra.mxu0 0.0
        %1845 = vmatprep.subr.mxu0 0.0
        %1846 = vmatpush1.xpose.msra.mxu0 0.0
        %1847 = vmatprep.subr.mxu0 0.0
        %1848 = vmatpush1.xpose.msra.mxu0 0.0
        %1849 = vmatprep.subr.mxu0 0.0
        %1850 = vmatpush1.xpose.msra.mxu0 0.0
        %1851 = vmatprep.subr.mxu0 0.0
        %1852 = vmatpush1.xpose.msra.mxu0 0.0
        %1853 = vmatprep.subr.mxu0 0.0
        %1854 = vmatpush1.xpose.msra.mxu0 0.0
        %1855 = vmatprep.subr.mxu0 0.0
        %1856 = vmatpush1.xpose.msra.mxu0 0.0
        %1857 = vmatprep.subr.mxu0 0.0
        %1858 = vmatpush1.xpose.msra.mxu0 0.0
        %1859 = vmatprep.subr.mxu0 0.0
        %1860 = vmatpush1.xpose.msra.mxu0 0.0
        %1861 = vmatprep.subr.mxu0 %v341
        %1862 = vmatpush1.xpose.msra.mxu0 %v340
        %1863 = vmatprep.subr.mxu0 %v339
        %1864 = vmatpush1.xpose.msra.mxu0 %v338
        %1865 = vmatprep.subr.mxu0 0.0
        %1866 = vmatpush2.xpose.msra.mxu0 0.0
        %1867 = vmatprep.subr.mxu0 0.0
        %1868 = vmatpush2.xpose.msra.mxu0 0.0
        %1869 = vmatprep.subr.mxu0 0.0
        %1870 = vmatpush2.xpose.msra.mxu0 0.0
        %1871 = vmatprep.subr.mxu0 0.0
        %1872 = vmatpush2.xpose.msra.mxu0 0.0
        %1873 = vmatprep.subr.mxu0 0.0
        %1874 = vmatpush2.xpose.msra.mxu0 0.0
        %1875 = vmatprep.subr.mxu0 0.0
        %1876 = vmatpush2.xpose.msra.mxu0 0.0
        %1877 = vmatprep.subr.mxu0 0.0
        %1878 = vmatpush2.xpose.msra.mxu0 0.0
        %1879 = vmatprep.subr.mxu0 0.0
        %1880 = vmatpush2.xpose.msra.mxu0 0.0
        %1881 = vmatprep.subr.mxu0 0.0
        %1882 = vmatpush2.xpose.msra.mxu0 0.0
        %1883 = vmatprep.subr.mxu0 0.0
        %1884 = vmatpush2.xpose.msra.mxu0 0.0
        %1885 = vmatprep.subr.mxu0 0.0
        %1886 = vmatpush2.xpose.msra.mxu0 0.0
        %1887 = vmatprep.subr.mxu0 0.0
        %1888 = vmatpush2.xpose.msra.mxu0 0.0
        %1889 = vmatprep.subr.mxu0 0.0
        %1890 = vmatpush2.xpose.msra.mxu0 0.0
        %1891 = vmatprep.subr.mxu0 0.0
        %1892 = vmatpush2.xpose.msra.mxu0 0.0
        %1893 = vmatprep.subr.mxu0 0.0
        %1894 = vmatpush2.xpose.msra.mxu0 0.0
        %1895 = vmatprep.subr.mxu0 0.0
        %1896 = vmatpush2.xpose.msra.mxu0 0.0
        %1897 = vmatprep.mubr.f32.mxu0 %v339
        %1898 = vmatmul.mubr.f32.gmra.mxu0 %v338
        %v1899 = vpop.f32.mrf.mxu0
        %v1900 = vadd.f32 0.0, %v1899
        %v1901 = vpop.f32.mrf.mxu0
        %1902 = vmatprep.mubr.f32.mxu0 %v341
        %1903 = vmatmul.mubr.f32.gmra.mxu0 %v340
        %v1904 = vpop.f32.mrf.mxu0
        %v1905 = vadd.f32 0.0, %v1904
        %v1906 = vpop.f32.mrf.mxu0
        %1907 = vdwg.mxu0
        %v1908 = vsel %vm415, %v1900, -inf
        %1909 = vmax.xlane.f32.xlu0 %v1908
        %v1910 = vpop.xlane.xlu0 %1909
        %v1911 = vsel %vm415, %v1905, -inf
        %1912 = vmax.xlane.f32.xlu0 %v1911
        %v1913 = vpop.xlane.xlu0 %1912
        %v1914 = vsub.f32 %v1910, %v1900
        %v1915 = vsub.f32 %v1913, %v1905
        %v1916 = vsel %vm415, %v1914, -inf
        %1917 = vmax.xlane.f32.xlu0 %v1916
        %v1918 = vpop.xlane.xlu0 %1917
        %v1919 = vsel %vm415, %v1915, -inf
        %1920 = vmax.xlane.f32.xlu0 %v1919
        %v1921 = vpop.xlane.xlu0 %1920
        %v1922 = vsub.f32 %v1914, %v1918
        %v1923 = vsub.f32 %v1915, %v1921
        %v1924 = vmul.f32 %v1922, 1.442695
        %v1925 = vpow.pop %v1924
        %v1926 = vmul.f32 %v1923, 1.442695
        %v1927 = vpow.pop %v1926
        %v1928 = vsel %vm415, %v1925, 0.0
        %1929 = vadd.xlane.f32.xlu0 %v1928
        %v1930 = vpop.xlane.xlu0 %1929
        %v1931 = vsel %vm415, %v1927, 0.0
        %1932 = vadd.xlane.f32.xlu0 %v1931
        %v1933 = vpop.xlane.xlu0 %1932
        %v1934 = vrcp.pop %v1930
        %v1935 = vmul.f32 %v1925, %v1934
        %v1936 = vrcp.pop %v1933
        %v1937 = vmul.f32 %v1927, %v1936
        %v1939 = vsel %vm415, %v1935, 0
        %v1942 = vsel %vm415, %v1937, 0
        %1944 = vmatprep.subr.mxu0 0.0
        %1945 = vmatpush1.msra.mxu0 0.0
        %1946 = vmatprep.subr.mxu0 0.0
        %1947 = vmatpush1.msra.mxu0 0.0
        %1948 = vmatprep.subr.mxu0 0.0
        %1949 = vmatpush1.msra.mxu0 0.0
        %1950 = vmatprep.subr.mxu0 0.0
        %1951 = vmatpush1.msra.mxu0 0.0
        %1952 = vmatprep.subr.mxu0 0.0
        %1953 = vmatpush1.msra.mxu0 0.0
        %1954 = vmatprep.subr.mxu0 0.0
        %1955 = vmatpush1.msra.mxu0 0.0
        %1956 = vmatprep.subr.mxu0 0.0
        %1957 = vmatpush1.msra.mxu0 0.0
        %1958 = vmatprep.subr.mxu0 0.0
        %1959 = vmatpush1.msra.mxu0 0.0
        %1960 = vmatprep.subr.mxu0 0.0
        %1961 = vmatpush1.msra.mxu0 0.0
        %1962 = vmatprep.subr.mxu0 0.0
        %1963 = vmatpush1.msra.mxu0 0.0
        %1964 = vmatprep.subr.mxu0 0.0
        %1965 = vmatpush1.msra.mxu0 0.0
        %1966 = vmatprep.subr.mxu0 0.0
        %1967 = vmatpush1.msra.mxu0 0.0
        %1968 = vmatprep.subr.mxu0 0.0
        %1969 = vmatpush1.msra.mxu0 0.0
        %1970 = vmatprep.subr.mxu0 0.0
        %1971 = vmatpush1.msra.mxu0 0.0
        %1972 = vmatprep.subr.mxu0 %v341
        %1973 = vmatpush1.msra.mxu0 %v340
        %1974 = vmatprep.subr.mxu0 %v339
        %1975 = vmatpush1.msra.mxu0 %v338
        %1976 = vmatprep.subr.mxu0 0.0
        %1977 = vmatpush2.msra.mxu0 0.0
        %1978 = vmatprep.subr.mxu0 0.0
        %1979 = vmatpush2.msra.mxu0 0.0
        %1980 = vmatprep.subr.mxu0 0.0
        %1981 = vmatpush2.msra.mxu0 0.0
        %1982 = vmatprep.subr.mxu0 0.0
        %1983 = vmatpush2.msra.mxu0 0.0
        %1984 = vmatprep.subr.mxu0 0.0
        %1985 = vmatpush2.msra.mxu0 0.0
        %1986 = vmatprep.subr.mxu0 0.0
        %1987 = vmatpush2.msra.mxu0 0.0
        %1988 = vmatprep.subr.mxu0 0.0
        %1989 = vmatpush2.msra.mxu0 0.0
        %1990 = vmatprep.subr.mxu0 0.0
        %1991 = vmatpush2.msra.mxu0 0.0
        %1992 = vmatprep.subr.mxu0 0.0
        %1993 = vmatpush2.msra.mxu0 0.0
        %1994 = vmatprep.subr.mxu0 0.0
        %1995 = vmatpush2.msra.mxu0 0.0
        %1996 = vmatprep.subr.mxu0 0.0
        %1997 = vmatpush2.msra.mxu0 0.0
        %1998 = vmatprep.subr.mxu0 0.0
        %1999 = vmatpush2.msra.mxu0 0.0
        %2000 = vmatprep.subr.mxu0 0.0
        %2001 = vmatpush2.msra.mxu0 0.0
        %2002 = vmatprep.subr.mxu0 0.0
        %2003 = vmatpush2.msra.mxu0 0.0
        %2004 = vmatprep.subr.mxu0 0.0
        %2005 = vmatpush2.msra.mxu0 0.0
        %2006 = vmatprep.subr.mxu0 0.0
        %2007 = vmatpush2.msra.mxu0 0.0
        %2008 = vmatprep.mubr.f32.mxu0 0.0
        %2009 = vmatmul.mubr.f32.gmra.mxu0 %v1939
        %v2010 = vpop.f32.mrf.mxu0
        %v2011 = vadd.f32 0.0, %v2010
        %v2012 = vpop.f32.mrf.mxu0
        %v2013 = vadd.f32 0.0, %v2012
        %2014 = vmatprep.mubr.f32.mxu0 0.0
        %2015 = vmatmul.mubr.f32.gmra.mxu0 %v1942
        %v2016 = vpop.f32.mrf.mxu0
        %v2017 = vadd.f32 0.0, %v2016
        %v2018 = vpop.f32.mrf.mxu0
        %v2019 = vadd.f32 0.0, %v2018
        %2020 = vdwg.mxu0
        %s2021 = sld [smem:[#allocation2]]
        %s2022 = sld [smem:[#allocation2 + $0x1]]
        %v2023 = vstv %s2021
        %v2024 = vmul.f32 %v2023, %v1823
        %v2025 = vmul.f32 %v2023, %v1825
        %v2026 = vmul.f32 %v2023, %v1829
        %v2027 = vmul.f32 %v2023, %v1831
        %v2028 = vstv %s2022
        %v2029 = vmul.f32 %v2028, %v2011
        %v2030 = vmul.f32 %v2028, %v2013
        %v2031 = vmul.f32 %v2028, %v2017
        %v2032 = vmul.f32 %v2028, %v2019
        %v2033 = vadd.f32 %v2024, %v2029
        %v2034 = vadd.f32 %v2025, %v2030
        %v2035 = vadd.f32 %v2026, %v2031
        %v2036 = vadd.f32 %v2027, %v2032
        %v2037 = vmul.f32 %v338, 2.0
        %v2038 = vmul.f32 %v339, 2.0
        %v2039 = vmul.f32 %v340, 2.0
        %v2040 = vmul.f32 %v341, 2.0
        %v2041 = vadd.f32 %v2033, %v2037
        %v2042 = vadd.f32 %v2034, %v2038
        %v2043 = vadd.f32 %v2035, %v2039
        %v2044 = vadd.f32 %v2036, %v2040
        %2045 = vst [vmem:[%s337] sm:$0xff] %v2041
        %2046 = vst [vmem:[%s337 + $0x8] sm:$0xff] %v2042
        %2047 = vst [vmem:[%s337 + $0x10] sm:$0xff] %v2043
        %2048 = vst [vmem:[%s337 + $0x18] sm:$0xff] %v2044
        %s2049 = sand.u32 %s207, 1
        %s2050 = scalar_lea.sflag [#allocation4], %s2049
        %s2051 = sand.u32 %s207, 1
        %s2052 = smul.addr %s2051, 32
        %s2053 = scalar_lea.vmem [#allocation7], %s2052
        // Predicated region
        $region61: #{tpu_custom_call.1} parent=51 // pred_check
          %p2054 = pneg %p217
        $region62: #{tpu_custom_call.1} parent=51 // pred_check_branch
          %2056 = sbr.rel (%p2054) target = $region64
        $region63: #{tpu_custom_call.1} parent=51 // pred_region
          %s2058 = ssub.s32 512, 512
          %2059 = vsyncadd %s2050, %s2058
          %s2060 = smul.addr %s26, 4
          %s2061 = smul.addr %s2060, 128
          %s2062 = scalar_lea.hbm %s8, %s2061
          %s2063 = sshll.u32 %s2053, 4
          %s2064 = int_to_ptr.vmem [resolvable:$true] %s2063
          %2069 = dma.vmem_to_hbm [thread:$0]  %s2064, 512, %s2062, %s2050, 256, 256, 16
        $region64: #{tpu_custom_call.1} parent=51 // pred_fallthru
          _
      $region52: #{tpu_custom_call.1} parent=5 // pred_fallthru
        _
      %p2070 = scmp.le.s32.totalorder 2, %s21
      // Predicated region
      $region65: #{tpu_custom_call.1} parent=5 // pred_check
        %p2071 = pneg %p2070
      $region66: #{tpu_custom_call.1} parent=5 // pred_check_branch
        %2073 = sbr.rel (%p2071) target = $region68
      $region67: #{tpu_custom_call.1} parent=5 // pred_region
        %s2074 = ssub.s32 %s21, 2
        // Predicated region
        $region69: #{tpu_custom_call.1} parent=67 // pred_check
          %p2075 = pneg %p223
        $region70: #{tpu_custom_call.1} parent=67 // pred_check_branch
          %2077 = sbr.rel (%p2075) target = $region72
        $region71: #{tpu_custom_call.1} parent=67 // pred_region
          %s2078 = sand.u32 %s208, 1
          %s2079 = scalar_lea.sflag [#allocation4], %s2078
          %s2080 = sand.u32 %s208, 1
          %s2081 = smul.addr %s2080, 32
          %s2082 = scalar_lea.vmem [#allocation7], %s2081
          %2083 = dma.done %s2079, 512
        $region72: #{tpu_custom_call.1} parent=67 // pred_fallthru
          _
      $region68: #{tpu_custom_call.1} parent=5 // pred_fallthru
        _
    $region6: #{tpu_custom_call.1} parent=1 // loop_footer
      %s25 = sadd.s32 1, %s21
    $region7: #{tpu_custom_call.1} parent=1 // loop_footer_branch
      %20 = sbr.rel target = $region3
    $region8: #{tpu_custom_call.1} parent=1 // loop_exit
      _
    %2084 = vsyncpa [#allocation3], 1
    %s2085 = scalar_lea.sflag [#allocation3], 1
    %2086 = vsyncpa %s2085, 1
    %2087 = vsyncpa [#allocation4], 1
    %s2088 = scalar_lea.sflag [#allocation4], 1
    %2089 = vsyncpa %s2088, 1
    %2090 = vsyncpa [#allocation5], 1
    %s2091 = scalar_lea.sflag [#allocation5], 1
    %2092 = vsyncpa %s2091, 1

</llo_original>
